<compile_context>
chip_gen: v7x
topology: tpu7x:2x2x1
jax: 0.10.0
libtpu: 0.0.40
codegen_flags: <defaults>
</compile_context>

<pallas_src>
import functools

import jax
import jax.numpy as jnp
from jax.experimental import pallas as pl
from jax.experimental.pallas import tpu as pltpu


def _round_up(v, m):
    return ((v + m - 1) // m) * m


def _pad2d(a, rows, cols):
    return jnp.pad(a, ((0, rows - a.shape[0]), (0, cols - a.shape[1])))


def _sage_layer_kernel(a_ref, xk_ref, xs_ref, wl_ref, bl_ref, wr_ref, o_ref,
                       acc_ref, *, reassociate, normalize, apply_relu):
    k = pl.program_id(1)

    @pl.when(k == 0)
    def _():
        acc_ref[...] = jnp.zeros_like(acc_ref)

    if reassociate:
        # A_tile @ (x_tile @ W_l): cheaper when F_out < F_in.
        t = jnp.dot(xk_ref[...], wl_ref[...], preferred_element_type=jnp.float32)
        acc_ref[...] += jnp.dot(a_ref[...], t.astype(a_ref.dtype),
                                preferred_element_type=jnp.float32)
    else:
        # (A_tile @ x_tile) @ W_l
        t = jnp.dot(a_ref[...], xk_ref[...], preferred_element_type=jnp.float32)
        acc_ref[...] += jnp.dot(t.astype(xk_ref.dtype), wl_ref[...],
                                preferred_element_type=jnp.float32)

    @pl.when(k == pl.num_programs(1) - 1)
    def _():
        out = acc_ref[...] + bl_ref[...]
        out = out + jnp.dot(xs_ref[...], wr_ref[...],
                            preferred_element_type=jnp.float32)
        if normalize:
            # F.normalize: out / max(||out||, 1e-12)  ==  out * rsqrt(max(||out||^2, 1e-24))
            ss = jnp.sum(out * out, axis=-1, keepdims=True)
            out = out * jax.lax.rsqrt(jnp.maximum(ss, 1e-24))
        if apply_relu:
            out = jnp.maximum(out, 0.0)
        o_ref[...] = out.astype(o_ref.dtype)


def sage_layer(a_norm, x, w_l, b_l, w_r, *, f_in, f_out, normalize=True,
               apply_relu=False, out_dtype=jnp.float32, tm=256, tk=256):
    """One SAGEConv layer on padded/bf16 inputs.

    a_norm: [N_pad, N_pad]  bf16 row-normalized adjacency (mean aggregation)
    x:      [N_pad, F_in_pad] bf16
    w_l,w_r:[F_in_pad, F_out_pad] bf16 (zero padding), b_l: [1, F_out_pad] f32
    """
    n_pad = a_norm.shape[0]
    f_in_pad = x.shape[1]
    f_out_pad = w_l.shape[1]
    tm = min(tm, n_pad)
    tk = min(tk, n_pad)
    grid = (pl.cdiv(n_pad, tm), pl.cdiv(n_pad, tk))

    reassociate = f_out < f_in  # put min(F_in, F_out) on the N^2 term

    kernel = functools.partial(_sage_layer_kernel, reassociate=reassociate,
                               normalize=normalize, apply_relu=apply_relu)

    c = f_out_pad if reassociate else f_in_pad
    out_itemsize = jnp.dtype(out_dtype).itemsize
    cost = pl.CostEstimate(
        flops=int(2 * n_pad * n_pad * c + 4 * n_pad * f_in_pad * f_out_pad),
        transcendentals=int(n_pad),
        bytes_accessed=int(n_pad * n_pad * 2 + 2 * n_pad * f_in_pad * 2
                           + 2 * f_in_pad * f_out_pad * 2 + f_out_pad * 4
                           + n_pad * f_out_pad * out_itemsize),
    )

    return pl.pallas_call(
        kernel,
        out_shape=jax.ShapeDtypeStruct((n_pad, f_out_pad), out_dtype),
        grid_spec=pltpu.PrefetchScalarGridSpec(
            num_scalar_prefetch=0,
            grid=grid,
            in_specs=[
                pl.BlockSpec((tm, tk), lambda i, k: (i, k)),           # A row/col tile
                pl.BlockSpec((tk, f_in_pad), lambda i, k: (k, 0)),      # x, contraction tile
                pl.BlockSpec((tm, f_in_pad), lambda i, k: (i, 0)),      # x, self (root) rows
                pl.BlockSpec((f_in_pad, f_out_pad), lambda i, k: (0, 0)),  # W_l (resident)
                pl.BlockSpec((1, f_out_pad), lambda i, k: (0, 0)),         # b_l (resident)
                pl.BlockSpec((f_in_pad, f_out_pad), lambda i, k: (0, 0)),  # W_r (resident)
            ],
            out_specs=pl.BlockSpec((tm, f_out_pad), lambda i, k: (i, 0)),
            scratch_shapes=[pltpu.VMEM((tm, f_out_pad), jnp.float32)],
        ),
        compiler_params=pltpu.CompilerParams(
            dimension_semantics=("parallel", "arbitrary")),
        cost_estimate=cost,
    )(a_norm, x, x, w_l, b_l, w_r)


def init_baseline_sage_params(key, in_channels, hidden_channels, out_channels,
                              num_layers=2):
    """Deterministic glorot-ish init. Each layer: (W_l[fin,fout], b_l[1,fout], W_r[fin,fout])."""
    params = []
    for i in range(num_layers):
        fin = in_channels if i == 0 else hidden_channels
        fout = out_channels if i == num_layers - 1 else hidden_channels
        key, k1, k2 = jax.random.split(key, 3)
        scale = (2.0 / (fin + fout)) ** 0.5
        w_l = scale * jax.random.normal(k1, (fin, fout), jnp.float32)
        w_r = scale * jax.random.normal(k2, (fin, fout), jnp.float32)
        b_l = jnp.zeros((1, fout), jnp.float32)
        params.append((w_l, b_l, w_r))
    return params


def baseline_sage_forward(params, x, edge_index, *, normalize=True,
                          tm=256, tk=256):
    """Forward pass of BaselineSAGE.

    x:          [num_nodes, in_channels] float32
    edge_index: [2, num_edges] int32   (row 0 = source j, row 1 = target i)
    returns     [num_nodes, out_channels] float32
    """
    n = x.shape[0]
    src = edge_index[0]
    dst = edge_index[1]

    # Pad node count so row/K tiles are full (padded rows/cols are zero and sliced off at the end).
    n_pad = _round_up(max(n, 1), tm)

    # Glue (plain JAX): dense row-normalized adjacency for mean aggregation; isolated nodes get an
    # all-zero row -> aggregated feature 0, same as scatter-mean.
    # TODO(synk): for very large graphs replace dense A with a CSR gather via PrefetchScalarGridSpec.
    a = jnp.zeros((n_pad, n_pad), jnp.float32).at[dst, src].add(1.0)
    deg = jnp.sum(a, axis=1, keepdims=True)
    a_norm = (a / jnp.maximum(deg, 1.0)).astype(jnp.bfloat16)

    num_layers = len(params)
    f_in0 = x.shape[1]
    f_in0_pad = _round_up(f_in0, 128)
    h = _pad2d(x.astype(jnp.float32), n_pad, f_in0_pad).astype(jnp.bfloat16)

    f_out_last = params[-1][0].shape[1]
    for i, (w_l, b_l, w_r) in enumerate(params):
        fin, fout = w_l.shape
        fin_pad = _round_up(fin, 128)
        fout_pad = _round_up(fout, 128)
        w_l_p = _pad2d(w_l, fin_pad, fout_pad).astype(jnp.bfloat16)
        w_r_p = _pad2d(w_r, fin_pad, fout_pad).astype(jnp.bfloat16)
        b_l_p = _pad2d(b_l, 1, fout_pad).astype(jnp.float32)
        last = (i == num_layers - 1)
        h = sage_layer(a_norm, h, w_l_p, b_l_p, w_r_p,
                       f_in=fin, f_out=fout,
                       normalize=normalize,
                       apply_relu=not last,
                       out_dtype=jnp.float32 if last else jnp.bfloat16,
                       tm=tm, tk=tk)
        # dropout p=0.0 -> identity (BaselineSAGE default), nothing to emit.

    return h[:n, :f_out_last]


def _reference_forward(params, x, edge_index, *, normalize=True):
    """Pure-JAX f32 reference (dense adjacency)."""
    n = x.shape[0]
    src, dst = edge_index[0], edge_index[1]
    a = jnp.zeros((n, n), jnp.float32).at[dst, src].add(1.0)
    deg = jnp.sum(a, axis=1, keepdims=True)
    a_norm = a / jnp.maximum(deg, 1.0)
    h = x.astype(jnp.float32)
    num_layers = len(params)
    for i, (w_l, b_l, w_r) in enumerate(params):
        agg = a_norm @ h
        out = agg @ w_l + b_l + h @ w_r
        if normalize:
            nrm = jnp.sqrt(jnp.sum(out * out, axis=-1, keepdims=True))
            out = out / jnp.maximum(nrm, 1e-12)
        if i < num_layers - 1:
            out = jnp.maximum(out, 0.0)
        h = out
    return h


if __name__ == "__main__":
    key = jax.random.PRNGKey(0)
    k_x, k_e, k_p = jax.random.split(key, 3)

    num_nodes = 32
    num_edges = 96
    in_channels = 16
    hidden_channels = 32
    out_channels = 8

    x = jax.random.normal(k_x, (num_nodes, in_channels), jnp.float32)
    edge_index = jax.random.randint(k_e, (2, num_edges), 0, num_nodes, jnp.int32)

    params = init_baseline_sage_params(k_p, in_channels, hidden_channels,
                                       out_channels, num_layers=2)

    out = baseline_sage_forward(params, x, edge_index, normalize=True)
    out = jax.block_until_ready(out)

    assert out.shape == (num_nodes, out_channels)
    assert jnp.all(jnp.isfinite(out))

    ref = _reference_forward(params, x, edge_index, normalize=True)
    max_err = float(jnp.max(jnp.abs(out - ref)))
    assert max_err < 5e-2, f"max abs error vs f32 reference too large: {max_err}"

    print("KERNEL_OK")
</pallas_src>

<mosaic_0001>
module attributes {stable_mosaic.version = 11 : i64} {
  func.func @_sage_layer_kernel(%arg0: i32, %arg1: i32, %arg2: memref<256x256xbf16, #tpu.memory_space<vmem>>, %arg3: memref<256x128xbf16, #tpu.memory_space<vmem>>, %arg4: memref<256x128xbf16, #tpu.memory_space<vmem>>, %arg5: memref<128x128xbf16, #tpu.memory_space<vmem>>, %arg6: memref<1x128xf32, #tpu.memory_space<vmem>>, %arg7: memref<128x128xbf16, #tpu.memory_space<vmem>>, %arg8: memref<256x128xbf16, #tpu.memory_space<vmem>>, %arg9: memref<256x128xf32, #tpu.memory_space<vmem>>) attributes {dimension_semantics = [#tpu.dimension_semantics<parallel>, #tpu.dimension_semantics<arbitrary>], iteration_bounds = array<i64: 1, 1>, scalar_prefetch = 0 : i64, scratch_operands = 1 : i64, tpu.core_type = #tpu.core_type<tc>, window_params = [{transform_indices = @transform_0, window_bounds = array<i64: 256, 256>}, {transform_indices = @transform_1, window_bounds = array<i64: 256, 128>}, {transform_indices = @transform_2, window_bounds = array<i64: 256, 128>}, {pipeline_mode = #tpu.pipeline_mode<synchronous>, transform_indices = @transform_3, window_bounds = array<i64: 128, 128>}, {pipeline_mode = #tpu.pipeline_mode<synchronous>, transform_indices = @transform_4, window_bounds = array<i64: 1, 128>}, {pipeline_mode = #tpu.pipeline_mode<synchronous>, transform_indices = @transform_5, window_bounds = array<i64: 128, 128>}, {transform_indices = @transform_6, window_bounds = array<i64: 256, 128>}]} {
    %c0_i32 = arith.constant 0 : i32
    %0 = arith.cmpi eq, %arg1, %c0_i32 : i32
    %1 = arith.extui %0 : i1 to i32
    %c0_i32_0 = arith.constant 0 : i32
    %2 = arith.cmpi ne, %1, %c0_i32_0 : i32
    scf.if %2 {
      %cst_13 = arith.constant 0.000000e+00 : f32
      %15 = vector.broadcast %cst_13 : f32 to vector<256x128xf32>
      %c0_14 = arith.constant 0 : index
      %c0_15 = arith.constant 0 : index
      %16 = vector.load %arg9[%c0_14, %c0_15] : memref<256x128xf32, #tpu.memory_space<vmem>>, vector<256x128xf32>
      tpu.vector_store %arg9[%c0_14, %c0_15], %15 {strides = array<i32>} : memref<256x128xf32, #tpu.memory_space<vmem>>, vector<256x128xf32>,
    } else {
    }
    %c0 = arith.constant 0 : index
    %c0_1 = arith.constant 0 : index
    %3 = vector.load %arg2[%c0, %c0_1] : memref<256x256xbf16, #tpu.memory_space<vmem>>, vector<256x256xbf16>
    %c0_2 = arith.constant 0 : index
    %c0_3 = arith.constant 0 : index
    %4 = vector.load %arg3[%c0_2, %c0_3] : memref<256x128xbf16, #tpu.memory_space<vmem>>, vector<256x128xbf16>
    %cst = arith.constant dense<0.000000e+00> : vector<256x128xf32>
    %5 = tpu.matmul %3, %4, %cst {dimension_numbers = #tpu.dot_dimension_numbers<[1], [0], [0], [1], [0, 0, 1, 1], [], []>} : vector<256x256xbf16>, vector<256x128xbf16>, vector<256x128xf32> -> vector<256x128xf32>
    %c0_4 = arith.constant 0 : index
    %c0_5 = arith.constant 0 : index
    %6 = vector.load %arg9[%c0_4, %c0_5] : memref<256x128xf32, #tpu.memory_space<vmem>>, vector<256x128xf32>
    %7 = arith.truncf %5 : vector<256x128xf32> to vector<256x128xbf16>
    %c0_6 = arith.constant 0 : index
    %c0_7 = arith.constant 0 : index
    %8 = vector.load %arg5[%c0_6, %c0_7] : memref<128x128xbf16, #tpu.memory_space<vmem>>, vector<128x128xbf16>
    %cst_8 = arith.constant dense<0.000000e+00> : vector<256x128xf32>
    %9 = tpu.matmul %7, %8, %cst_8 {dimension_numbers = #tpu.dot_dimension_numbers<[1], [0], [0], [1], [0, 0, 1, 1], [], []>} : vector<256x128xbf16>, vector<128x128xbf16>, vector<256x128xf32> -> vector<256x128xf32>
    %10 = arith.addf %6, %9 : vector<256x128xf32>
    %c0_9 = arith.constant 0 : index
    %c0_10 = arith.constant 0 : index
    %11 = vector.load %arg9[%c0_9, %c0_10] : memref<256x128xf32, #tpu.memory_space<vmem>>, vector<256x128xf32>
    tpu.vector_store %arg9[%c0_9, %c0_10], %10 {strides = array<i32>} : memref<256x128xf32, #tpu.memory_space<vmem>>, vector<256x128xf32>,
    %c0_i32_11 = arith.constant 0 : i32
    %12 = arith.cmpi eq, %arg1, %c0_i32_11 : i32
    %13 = arith.extui %12 : i1 to i32
    %c0_i32_12 = arith.constant 0 : i32
    %14 = arith.cmpi ne, %13, %c0_i32_12 : i32
    scf.if %14 {
      %c0_13 = arith.constant 0 : index
      %c0_14 = arith.constant 0 : index
      %15 = vector.load %arg9[%c0_13, %c0_14] : memref<256x128xf32, #tpu.memory_space<vmem>>, vector<256x128xf32>
      %c0_15 = arith.constant 0 : index
      %c0_16 = arith.constant 0 : index
      %16 = vector.load %arg6[%c0_15, %c0_16] : memref<1x128xf32, #tpu.memory_space<vmem>>, vector<1x128xf32>
      %17 = vector.broadcast %16 : vector<1x128xf32> to vector<256x128xf32>
      %18 = arith.addf %15, %17 : vector<256x128xf32>
      %c0_17 = arith.constant 0 : index
      %c0_18 = arith.constant 0 : index
      %19 = vector.load %arg4[%c0_17, %c0_18] : memref<256x128xbf16, #tpu.memory_space<vmem>>, vector<256x128xbf16>
      %c0_19 = arith.constant 0 : index
      %c0_20 = arith.constant 0 : index
      %20 = vector.load %arg7[%c0_19, %c0_20] : memref<128x128xbf16, #tpu.memory_space<vmem>>, vector<128x128xbf16>
      %cst_21 = arith.constant dense<0.000000e+00> : vector<256x128xf32>
      %21 = tpu.matmul %19, %20, %cst_21 {dimension_numbers = #tpu.dot_dimension_numbers<[1], [0], [0], [1], [0, 0, 1, 1], [], []>} : vector<256x128xbf16>, vector<128x128xbf16>, vector<256x128xf32> -> vector<256x128xf32>
      %22 = arith.addf %18, %21 : vector<256x128xf32>
      %23 = arith.mulf %22, %22 : vector<256x128xf32>
      %cst_22 = arith.constant dense<0.000000e+00> : vector<256xf32>
      %24 = vector.multi_reduction <add>, %23, %cst_22 [1] : vector<256x128xf32> to vector<256xf32>
      %25 = vector.shape_cast %24 : vector<256xf32> to vector<256x1xf32>
      %cst_23 = arith.constant 1.000000e-24 : f32
      %26 = vector.broadcast %cst_23 : f32 to vector<256x1xf32>
      %27 = arith.maximumf %25, %26 : vector<256x1xf32>
      %28 = math.rsqrt %27 : vector<256x1xf32>
      %29 = vector.broadcast %28 : vector<256x1xf32> to vector<256x128xf32>
      %30 = arith.mulf %22, %29 : vector<256x128xf32>
      %cst_24 = arith.constant 0.000000e+00 : f32
      %31 = vector.broadcast %cst_24 : f32 to vector<256x128xf32>
      %32 = arith.maximumf %30, %31 : vector<256x128xf32>
      %33 = arith.truncf %32 : vector<256x128xf32> to vector<256x128xbf16>
      %c0_25 = arith.constant 0 : index
      %c0_26 = arith.constant 0 : index
      %34 = vector.load %arg8[%c0_25, %c0_26] : memref<256x128xbf16, #tpu.memory_space<vmem>>, vector<256x128xbf16>
      tpu.vector_store %arg8[%c0_25, %c0_26], %33 {strides = array<i32>} : memref<256x128xbf16, #tpu.memory_space<vmem>>, vector<256x128xbf16>,
    } else {
    }
    return
  }
  func.func @transform_0(%arg0: i32, %arg1: i32) -> (i32, i32) {
    %c0_i32 = arith.constant 0 : i32
    return %arg0, %arg1 : i32, i32
  }
  func.func @transform_1(%arg0: i32, %arg1: i32) -> (i32, i32) {
    %c0_i32 = arith.constant 0 : i32
    %c0_i32_0 = arith.constant 0 : i32
    return %arg1, %c0_i32 : i32, i32
  }
  func.func @transform_2(%arg0: i32, %arg1: i32) -> (i32, i32) {
    %c0_i32 = arith.constant 0 : i32
    %c0_i32_0 = arith.constant 0 : i32
    return %arg0, %c0_i32 : i32, i32
  }
  func.func @transform_3(%arg0: i32, %arg1: i32) -> (i32, i32) {
    %c0_i32 = arith.constant 0 : i32
    %c0_i32_0 = arith.constant 0 : i32
    %c0_i32_1 = arith.constant 0 : i32
    return %c0_i32, %c0_i32_0 : i32, i32
  }
  func.func @transform_4(%arg0: i32, %arg1: i32) -> (i32, i32) {
    %c0_i32 = arith.constant 0 : i32
    %c0_i32_0 = arith.constant 0 : i32
    %c0_i32_1 = arith.constant 0 : i32
    return %c0_i32, %c0_i32_0 : i32, i32
  }
  func.func @transform_5(%arg0: i32, %arg1: i32) -> (i32, i32) {
    %c0_i32 = arith.constant 0 : i32
    %c0_i32_0 = arith.constant 0 : i32
    %c0_i32_1 = arith.constant 0 : i32
    return %c0_i32, %c0_i32_0 : i32, i32
  }
  func.func @transform_6(%arg0: i32, %arg1: i32) -> (i32, i32) {
    %c0_i32 = arith.constant 0 : i32
    %c0_i32_0 = arith.constant 0 : i32
    return %arg0, %c0_i32 : i32, i32
  }
}

</mosaic_0001>

<llo_original>
// kernel: tpu_custom_call.1
$region0: #{tpu_custom_call.1}
  #allocation0 [shape = 'u32[]', space=smem, size = 0x4, offset = 0x4, fixed_abs, tag = 'smem constant byte address 0x4 - core index']
  #allocation1 [shape = 'u32[144,128]{1,0:T(1,128)}', space=vmem, size = 0x12000, scoped, tag = 'internal scratch']
  #allocation2 [shape = 'f32[256,128]{1,0:T(8,128)}', space=vmem, size = 0x20000, scoped, tag = 'scratch operand']
  %s0 = inlined_call_operand.hbm [shape: bf16[256,256], index: 0, kind: input, shape index: {}]
  %s1 = inlined_call_operand.hbm [shape: bf16[256,128], index: 1, kind: input, shape index: {}]
  %s2 = inlined_call_operand.hbm [shape: bf16[256,128], index: 2, kind: input, shape index: {}]
  %s3 = inlined_call_operand.hbm [shape: bf16[128,128], index: 3, kind: input, shape index: {}]
  %s4 = inlined_call_operand.vmem [shape: f32[1,128], index: 4, kind: input, shape index: {}]
  %s5 = inlined_call_operand.hbm [shape: bf16[128,128], index: 5, kind: input, shape index: {}]
  %s6 = inlined_call_operand.hbm [shape: bf16[256,128], index: 6, kind: output, shape index: {}]
  %s7 = sld [smem:[#allocation0]]
  $region62: #{tpu_custom_call.1} parent=0
    _
  %s9 = ssub.s32 1, %s7
  %s10 = scalar_select 0, %s9, %s7
  $region1: #{tpu_custom_call.1} parent=0
    #allocation3 [shape = 'u8[131072]{0}', space=vmem, size = 0x20000, scoped, tag = 'input window, operand 0, single buffered']
    #allocation4 [shape = 's32[1]{0}', space=sflag, size = 0x4, scoped, tag = 'scoped memory for tpu_custom_call.1']
    #allocation5 [shape = 's32[1]{0}', space=sflag, size = 0x4, scoped, tag = 'scoped memory for tpu_custom_call.1']
    #allocation6 [shape = 'u8[65536]{0}', space=vmem, size = 0x10000, scoped, tag = 'input window, operand 1, single buffered']
    #allocation7 [shape = 's32[1]{0}', space=sflag, size = 0x4, scoped, tag = 'scoped memory for tpu_custom_call.1']
    #allocation8 [shape = 'u8[65536]{0}', space=vmem, size = 0x10000, scoped, tag = 'input window, operand 2, single buffered']
    #allocation9 [shape = 'u8[32768]{0}', space=vmem, size = 0x8000, scoped, tag = 'input window, operand 3, single buffered']
    #allocation10 [shape = 's32[1]{0}', space=sflag, size = 0x4, scoped, tag = 'scoped memory for tpu_custom_call.1']
    #allocation11 [shape = 'u8[32768]{0}', space=vmem, size = 0x8000, scoped, tag = 'input window, operand 5, single buffered']
    #allocation12 [shape = 'u8[65536]{0}', space=vmem, size = 0x10000, scoped, tag = 'output window, operand 0, single buffered']
    %11 = vsyncpa [#allocation4], 0
    %12 = vsyncpa [#allocation7], 0
    %13 = vsyncpa [#allocation10], 0
    %14 = vsyncpa [#allocation5], 0
    // Predicated region
    $region2: #{tpu_custom_call.1} parent=1 // pred_check
      _
    $region3: #{tpu_custom_call.1} parent=1 // pred_check_branch
      %16 = sbr.rel (0) target = $region5
    $region4: #{tpu_custom_call.1} parent=1 // pred_region
      %s18 = ssub.s32 4096, 4096
      %19 = vsyncadd [#allocation4], %s18
      %s20 = sshll.u32 [#allocation3], 4
      %s21 = int_to_ptr.vmem [resolvable:$true] %s20
      %26 = dma.hbm_to_vmem [thread:$0]  %s0, 4096, %s21, [#allocation4], 128, 128, 8
    $region5: #{tpu_custom_call.1} parent=1 // pred_fallthru
      _
    // Predicated region
    $region6: #{tpu_custom_call.1} parent=1 // pred_check
      _
    $region7: #{tpu_custom_call.1} parent=1 // pred_check_branch
      %28 = sbr.rel (0) target = $region9
    $region8: #{tpu_custom_call.1} parent=1 // pred_region
      %s30 = ssub.s32 2048, 2048
      %31 = vsyncadd [#allocation7], %s30
      %s32 = sshll.u32 [#allocation6], 4
      %s33 = int_to_ptr.vmem [resolvable:$true] %s32
      %38 = dma.hbm_to_vmem [thread:$0]  %s1, 2048, %s33, [#allocation7], 64, 64, 4
    $region9: #{tpu_custom_call.1} parent=1 // pred_fallthru
      _
    // Predicated region
    $region10: #{tpu_custom_call.1} parent=1 // pred_check
      _
    $region11: #{tpu_custom_call.1} parent=1 // pred_check_branch
      %40 = sbr.rel (0) target = $region13
    $region12: #{tpu_custom_call.1} parent=1 // pred_region
      %s42 = ssub.s32 2048, 2048
      %43 = vsyncadd [#allocation7], %s42
      %s44 = sshll.u32 [#allocation8], 4
      %s45 = int_to_ptr.vmem [resolvable:$true] %s44
      %50 = dma.hbm_to_vmem [thread:$0]  %s2, 2048, %s45, [#allocation7], 64, 64, 4
    $region13: #{tpu_custom_call.1} parent=1 // pred_fallthru
      _
    // Predicated region
    $region14: #{tpu_custom_call.1} parent=1 // pred_check
      _
    $region15: #{tpu_custom_call.1} parent=1 // pred_check_branch
      %52 = sbr.rel (0) target = $region17
    $region16: #{tpu_custom_call.1} parent=1 // pred_region
      %s54 = ssub.s32 1024, 1024
      %55 = vsyncadd [#allocation10], %s54
      %s56 = sshll.u32 [#allocation9], 4
      %s57 = int_to_ptr.vmem [resolvable:$true] %s56
      %62 = dma.hbm_to_vmem [thread:$0]  %s3, 1024, %s57, [#allocation10], 64, 64, 4
    $region17: #{tpu_custom_call.1} parent=1 // pred_fallthru
      _
    // Predicated region
    $region18: #{tpu_custom_call.1} parent=1 // pred_check
      _
    $region19: #{tpu_custom_call.1} parent=1 // pred_check_branch
      %64 = sbr.rel (0) target = $region21
    $region20: #{tpu_custom_call.1} parent=1 // pred_region
      _
    $region21: #{tpu_custom_call.1} parent=1 // pred_fallthru
      _
    // Predicated region
    $region22: #{tpu_custom_call.1} parent=1 // pred_check
      _
    $region23: #{tpu_custom_call.1} parent=1 // pred_check_branch
      %66 = sbr.rel (0) target = $region25
    $region24: #{tpu_custom_call.1} parent=1 // pred_region
      %s68 = ssub.s32 1024, 1024
      %69 = vsyncadd [#allocation10], %s68
      %s70 = sshll.u32 [#allocation11], 4
      %s71 = int_to_ptr.vmem [resolvable:$true] %s70
      %76 = dma.hbm_to_vmem [thread:$0]  %s5, 1024, %s71, [#allocation10], 64, 64, 4
    $region25: #{tpu_custom_call.1} parent=1 // pred_fallthru
      _
    // Predicated region
    $region26: #{tpu_custom_call.1} parent=1 // pred_check
      _
    $region27: #{tpu_custom_call.1} parent=1 // pred_check_branch
      %78 = sbr.rel (0) target = $region29
    $region28: #{tpu_custom_call.1} parent=1 // pred_region
      %79 = dma.done [#allocation4], 4096
    $region29: #{tpu_custom_call.1} parent=1 // pred_fallthru
      _
    // Predicated region
    $region30: #{tpu_custom_call.1} parent=1 // pred_check
      _
    $region31: #{tpu_custom_call.1} parent=1 // pred_check_branch
      %81 = sbr.rel (0) target = $region33
    $region32: #{tpu_custom_call.1} parent=1 // pred_region
      %82 = dma.done [#allocation7], 2048
    $region33: #{tpu_custom_call.1} parent=1 // pred_fallthru
      _
    // Predicated region
    $region34: #{tpu_custom_call.1} parent=1 // pred_check
      _
    $region35: #{tpu_custom_call.1} parent=1 // pred_check_branch
      %84 = sbr.rel (0) target = $region37
    $region36: #{tpu_custom_call.1} parent=1 // pred_region
      %85 = dma.done [#allocation7], 2048
    $region37: #{tpu_custom_call.1} parent=1 // pred_fallthru
      _
    // Predicated region
    $region38: #{tpu_custom_call.1} parent=1 // pred_check
      _
    $region39: #{tpu_custom_call.1} parent=1 // pred_check_branch
      %87 = sbr.rel (0) target = $region41
    $region40: #{tpu_custom_call.1} parent=1 // pred_region
      %88 = dma.done [#allocation10], 1024
    $region41: #{tpu_custom_call.1} parent=1 // pred_fallthru
      _
    // Predicated region
    $region42: #{tpu_custom_call.1} parent=1 // pred_check
      _
    $region43: #{tpu_custom_call.1} parent=1 // pred_check_branch
      %90 = sbr.rel (0) target = $region45
    $region44: #{tpu_custom_call.1} parent=1 // pred_region
      %91 = dma.done [#allocation10], 1024
    $region45: #{tpu_custom_call.1} parent=1 // pred_fallthru
      _
    %p93 = scmp.eq.s32.totalorder 0, 0
    // Predicated region
    $region46: #{tpu_custom_call.1} parent=1 // pred_check
      %p94 = pneg %p93
    $region47: #{tpu_custom_call.1} parent=1 // pred_check_branch
      %96 = sbr.rel (%p94) target = $region49
    $region48: #{tpu_custom_call.1} parent=1 // pred_region
      %97 = vst [vmem:[#allocation2] sm:$0xff] 0.0
      %98 = vst [vmem:[#allocation2 + $0x8] sm:$0xff] 0.0
      %99 = vst [vmem:[#allocation2 + $0x10] sm:$0xff] 0.0
      %100 = vst [vmem:[#allocation2 + $0x18] sm:$0xff] 0.0
      %101 = vst [vmem:[#allocation2 + $0x20] sm:$0xff] 0.0
      %102 = vst [vmem:[#allocation2 + $0x28] sm:$0xff] 0.0
      %103 = vst [vmem:[#allocation2 + $0x30] sm:$0xff] 0.0
      %104 = vst [vmem:[#allocation2 + $0x38] sm:$0xff] 0.0
      %105 = vst [vmem:[#allocation2 + $0x40] sm:$0xff] 0.0
      %106 = vst [vmem:[#allocation2 + $0x48] sm:$0xff] 0.0
      %107 = vst [vmem:[#allocation2 + $0x50] sm:$0xff] 0.0
      %108 = vst [vmem:[#allocation2 + $0x58] sm:$0xff] 0.0
      %109 = vst [vmem:[#allocation2 + $0x60] sm:$0xff] 0.0
      %110 = vst [vmem:[#allocation2 + $0x68] sm:$0xff] 0.0
      %111 = vst [vmem:[#allocation2 + $0x70] sm:$0xff] 0.0
      %112 = vst [vmem:[#allocation2 + $0x78] sm:$0xff] 0.0
      %113 = vst [vmem:[#allocation2 + $0x80] sm:$0xff] 0.0
      %114 = vst [vmem:[#allocation2 + $0x88] sm:$0xff] 0.0
      %115 = vst [vmem:[#allocation2 + $0x90] sm:$0xff] 0.0
      %116 = vst [vmem:[#allocation2 + $0x98] sm:$0xff] 0.0
      %117 = vst [vmem:[#allocation2 + $0xa0] sm:$0xff] 0.0
      %118 = vst [vmem:[#allocation2 + $0xa8] sm:$0xff] 0.0
      %119 = vst [vmem:[#allocation2 + $0xb0] sm:$0xff] 0.0
      %120 = vst [vmem:[#allocation2 + $0xb8] sm:$0xff] 0.0
      %121 = vst [vmem:[#allocation2 + $0xc0] sm:$0xff] 0.0
      %122 = vst [vmem:[#allocation2 + $0xc8] sm:$0xff] 0.0
      %123 = vst [vmem:[#allocation2 + $0xd0] sm:$0xff] 0.0
      %124 = vst [vmem:[#allocation2 + $0xd8] sm:$0xff] 0.0
      %125 = vst [vmem:[#allocation2 + $0xe0] sm:$0xff] 0.0
      %126 = vst [vmem:[#allocation2 + $0xe8] sm:$0xff] 0.0
      %127 = vst [vmem:[#allocation2 + $0xf0] sm:$0xff] 0.0
      %128 = vst [vmem:[#allocation2 + $0xf8] sm:$0xff] 0.0
    $region49: #{tpu_custom_call.1} parent=1 // pred_fallthru
      _
    %v129 = vld [vmem:[#allocation3] sm:$0xff]
    %v130 = vld [vmem:[#allocation3 + $0x8] sm:$0xff]
    %v131 = vld [vmem:[#allocation3 + $0x10] sm:$0xff]
    %v132 = vld [vmem:[#allocation3 + $0x18] sm:$0xff]
    %v133 = vld [vmem:[#allocation3 + $0x20] sm:$0xff]
    %v134 = vld [vmem:[#allocation3 + $0x28] sm:$0xff]
    %v135 = vld [vmem:[#allocation3 + $0x30] sm:$0xff]
    %v136 = vld [vmem:[#allocation3 + $0x38] sm:$0xff]
    %v137 = vld [vmem:[#allocation3 + $0x40] sm:$0xff]
    %v138 = vld [vmem:[#allocation3 + $0x48] sm:$0xff]
    %v139 = vld [vmem:[#allocation3 + $0x50] sm:$0xff]
    %v140 = vld [vmem:[#allocation3 + $0x58] sm:$0xff]
    %v141 = vld [vmem:[#allocation3 + $0x60] sm:$0xff]
    %v142 = vld [vmem:[#allocation3 + $0x68] sm:$0xff]
    %v143 = vld [vmem:[#allocation3 + $0x70] sm:$0xff]
    %v144 = vld [vmem:[#allocation3 + $0x78] sm:$0xff]
    %v145 = vld [vmem:[#allocation3 + $0x80] sm:$0xff]
    %v146 = vld [vmem:[#allocation3 + $0x88] sm:$0xff]
    %v147 = vld [vmem:[#allocation3 + $0x90] sm:$0xff]
    %v148 = vld [vmem:[#allocation3 + $0x98] sm:$0xff]
    %v149 = vld [vmem:[#allocation3 + $0xa0] sm:$0xff]
    %v150 = vld [vmem:[#allocation3 + $0xa8] sm:$0xff]
    %v151 = vld [vmem:[#allocation3 + $0xb0] sm:$0xff]
    %v152 = vld [vmem:[#allocation3 + $0xb8] sm:$0xff]
    %v153 = vld [vmem:[#allocation3 + $0xc0] sm:$0xff]
    %v154 = vld [vmem:[#allocation3 + $0xc8] sm:$0xff]
    %v155 = vld [vmem:[#allocation3 + $0xd0] sm:$0xff]
    %v156 = vld [vmem:[#allocation3 + $0xd8] sm:$0xff]
    %v157 = vld [vmem:[#allocation3 + $0xe0] sm:$0xff]
    %v158 = vld [vmem:[#allocation3 + $0xe8] sm:$0xff]
    %v159 = vld [vmem:[#allocation3 + $0xf0] sm:$0xff]
    %v160 = vld [vmem:[#allocation3 + $0xf8] sm:$0xff]
    %v161 = vld [vmem:[#allocation6] sm:$0xf]
    %v162 = vld [vmem:[#allocation6 + $0x4] sm:$0xf]
    %v163 = vld [vmem:[#allocation6 + $0x8] sm:$0xf]
    %v164 = vld [vmem:[#allocation6 + $0xc] sm:$0xf]
    %v165 = vld [vmem:[#allocation6 + $0x10] sm:$0xf]
    %v166 = vld [vmem:[#allocation6 + $0x14] sm:$0xf]
    %v167 = vld [vmem:[#allocation6 + $0x18] sm:$0xf]
    %v168 = vld [vmem:[#allocation6 + $0x1c] sm:$0xf]
    %v169 = vld [vmem:[#allocation6 + $0x20] sm:$0xf]
    %v170 = vld [vmem:[#allocation6 + $0x24] sm:$0xf]
    %v171 = vld [vmem:[#allocation6 + $0x28] sm:$0xf]
    %v172 = vld [vmem:[#allocation6 + $0x2c] sm:$0xf]
    %v173 = vld [vmem:[#allocation6 + $0x30] sm:$0xf]
    %v174 = vld [vmem:[#allocation6 + $0x34] sm:$0xf]
    %v175 = vld [vmem:[#allocation6 + $0x38] sm:$0xf]
    %v176 = vld [vmem:[#allocation6 + $0x3c] sm:$0xf]
    %v177 = vld [vmem:[#allocation6 + $0x40] sm:$0xf]
    %v178 = vld [vmem:[#allocation6 + $0x44] sm:$0xf]
    %v179 = vld [vmem:[#allocation6 + $0x48] sm:$0xf]
    %v180 = vld [vmem:[#allocation6 + $0x4c] sm:$0xf]
    %v181 = vld [vmem:[#allocation6 + $0x50] sm:$0xf]
    %v182 = vld [vmem:[#allocation6 + $0x54] sm:$0xf]
    %v183 = vld [vmem:[#allocation6 + $0x58] sm:$0xf]
    %v184 = vld [vmem:[#allocation6 + $0x5c] sm:$0xf]
    %v185 = vld [vmem:[#allocation6 + $0x60] sm:$0xf]
    %v186 = vld [vmem:[#allocation6 + $0x64] sm:$0xf]
    %v187 = vld [vmem:[#allocation6 + $0x68] sm:$0xf]
    %v188 = vld [vmem:[#allocation6 + $0x6c] sm:$0xf]
    %v189 = vld [vmem:[#allocation6 + $0x70] sm:$0xf]
    %v190 = vld [vmem:[#allocation6 + $0x74] sm:$0xf]
    %v191 = vld [vmem:[#allocation6 + $0x78] sm:$0xf]
    %v192 = vld [vmem:[#allocation6 + $0x7c] sm:$0xf]
    %v225 = vunpack.c.l.b16 %v129
    %v226 = vunpack.c.h.b16 %v129
    %v227 = vunpack.c.l.b16 %v130
    %v228 = vunpack.c.h.b16 %v130
    %v229 = vunpack.c.l.b16 %v131
    %v230 = vunpack.c.h.b16 %v131
    %v231 = vunpack.c.l.b16 %v132
    %v232 = vunpack.c.h.b16 %v132
    %v233 = vunpack.c.l.b16 %v133
    %v234 = vunpack.c.h.b16 %v133
    %v235 = vunpack.c.l.b16 %v134
    %v236 = vunpack.c.h.b16 %v134
    %v237 = vunpack.c.l.b16 %v135
    %v238 = vunpack.c.h.b16 %v135
    %v239 = vunpack.c.l.b16 %v136
    %v240 = vunpack.c.h.b16 %v136
    %v241 = vunpack.c.l.b16 %v137
    %v242 = vunpack.c.h.b16 %v137
    %v243 = vunpack.c.l.b16 %v138
    %v244 = vunpack.c.h.b16 %v138
    %v245 = vunpack.c.l.b16 %v139
    %v246 = vunpack.c.h.b16 %v139
    %v247 = vunpack.c.l.b16 %v140
    %v248 = vunpack.c.h.b16 %v140
    %v249 = vunpack.c.l.b16 %v141
    %v250 = vunpack.c.h.b16 %v141
    %v251 = vunpack.c.l.b16 %v142
    %v252 = vunpack.c.h.b16 %v142
    %v253 = vunpack.c.l.b16 %v143
    %v254 = vunpack.c.h.b16 %v143
    %v255 = vunpack.c.l.b16 %v144
    %v256 = vunpack.c.h.b16 %v144
    %v257 = vunpack.c.l.b16 %v145
    %v258 = vunpack.c.h.b16 %v145
    %v259 = vunpack.c.l.b16 %v146
    %v260 = vunpack.c.h.b16 %v146
    %v261 = vunpack.c.l.b16 %v147
    %v262 = vunpack.c.h.b16 %v147
    %v263 = vunpack.c.l.b16 %v148
    %v264 = vunpack.c.h.b16 %v148
    %v265 = vunpack.c.l.b16 %v149
    %v266 = vunpack.c.h.b16 %v149
    %v267 = vunpack.c.l.b16 %v150
    %v268 = vunpack.c.h.b16 %v150
    %v269 = vunpack.c.l.b16 %v151
    %v270 = vunpack.c.h.b16 %v151
    %v271 = vunpack.c.l.b16 %v152
    %v272 = vunpack.c.h.b16 %v152
    %v273 = vunpack.c.l.b16 %v153
    %v274 = vunpack.c.h.b16 %v153
    %v275 = vunpack.c.l.b16 %v154
    %v276 = vunpack.c.h.b16 %v154
    %v277 = vunpack.c.l.b16 %v155
    %v278 = vunpack.c.h.b16 %v155
    %v279 = vunpack.c.l.b16 %v156
    %v280 = vunpack.c.h.b16 %v156
    %v281 = vunpack.c.l.b16 %v157
    %v282 = vunpack.c.h.b16 %v157
    %v283 = vunpack.c.l.b16 %v158
    %v284 = vunpack.c.h.b16 %v158
    %v285 = vunpack.c.l.b16 %v159
    %v286 = vunpack.c.h.b16 %v159
    %v287 = vunpack.c.l.b16 %v160
    %v288 = vunpack.c.h.b16 %v160
    %v289 = vpack.c.b16 %v227, %v225
    %v290 = vpack.c.b16 %v228, %v226
    %v291 = vpack.c.b16 %v231, %v229
    %v292 = vpack.c.b16 %v232, %v230
    %v293 = vpack.c.b16 %v235, %v233
    %v294 = vpack.c.b16 %v236, %v234
    %v295 = vpack.c.b16 %v239, %v237
    %v296 = vpack.c.b16 %v240, %v238
    %v297 = vpack.c.b16 %v243, %v241
    %v298 = vpack.c.b16 %v244, %v242
    %v299 = vpack.c.b16 %v247, %v245
    %v300 = vpack.c.b16 %v248, %v246
    %v301 = vpack.c.b16 %v251, %v249
    %v302 = vpack.c.b16 %v252, %v250
    %v303 = vpack.c.b16 %v255, %v253
    %v304 = vpack.c.b16 %v256, %v254
    %v305 = vpack.c.b16 %v259, %v257
    %v306 = vpack.c.b16 %v260, %v258
    %v307 = vpack.c.b16 %v263, %v261
    %v308 = vpack.c.b16 %v264, %v262
    %v309 = vpack.c.b16 %v267, %v265
    %v310 = vpack.c.b16 %v268, %v266
    %v311 = vpack.c.b16 %v271, %v269
    %v312 = vpack.c.b16 %v272, %v270
    %v313 = vpack.c.b16 %v275, %v273
    %v314 = vpack.c.b16 %v276, %v274
    %v315 = vpack.c.b16 %v279, %v277
    %v316 = vpack.c.b16 %v280, %v278
    %v317 = vpack.c.b16 %v283, %v281
    %v318 = vpack.c.b16 %v284, %v282
    %v319 = vpack.c.b16 %v287, %v285
    %v320 = vpack.c.b16 %v288, %v286
    %v385 = vunpack.c.l.b16 %v161
    %v386 = vunpack.c.l.b16 %v162
    %v387 = vunpack.c.l.b16 %v163
    %v388 = vunpack.c.l.b16 %v164
    %v389 = vunpack.c.l.b16 %v165
    %v390 = vunpack.c.l.b16 %v166
    %v391 = vunpack.c.l.b16 %v167
    %v392 = vunpack.c.l.b16 %v168
    %v393 = vunpack.c.l.b16 %v169
    %v394 = vunpack.c.l.b16 %v170
    %v395 = vunpack.c.l.b16 %v171
    %v396 = vunpack.c.l.b16 %v172
    %v397 = vunpack.c.l.b16 %v173
    %v398 = vunpack.c.l.b16 %v174
    %v399 = vunpack.c.l.b16 %v175
    %v400 = vunpack.c.l.b16 %v176
    %v401 = vunpack.c.l.b16 %v177
    %v402 = vunpack.c.l.b16 %v178
    %v403 = vunpack.c.l.b16 %v179
    %v404 = vunpack.c.l.b16 %v180
    %v405 = vunpack.c.l.b16 %v181
    %v406 = vunpack.c.l.b16 %v182
    %v407 = vunpack.c.l.b16 %v183
    %v408 = vunpack.c.l.b16 %v184
    %v409 = vunpack.c.l.b16 %v185
    %v410 = vunpack.c.l.b16 %v186
    %v411 = vunpack.c.l.b16 %v187
    %v412 = vunpack.c.l.b16 %v188
    %v413 = vunpack.c.l.b16 %v189
    %v414 = vunpack.c.l.b16 %v190
    %v415 = vunpack.c.l.b16 %v191
    %v416 = vunpack.c.l.b16 %v192
    %v417 = vpack.c.b16 %v386, %v385
    %v418 = vpack.c.b16 %v388, %v387
    %v419 = vpack.c.b16 %v390, %v389
    %v420 = vpack.c.b16 %v392, %v391
    %v421 = vpack.c.b16 %v394, %v393
    %v422 = vpack.c.b16 %v396, %v395
    %v423 = vpack.c.b16 %v398, %v397
    %v424 = vpack.c.b16 %v400, %v399
    %v425 = vpack.c.b16 %v402, %v401
    %v426 = vpack.c.b16 %v404, %v403
    %v427 = vpack.c.b16 %v406, %v405
    %v428 = vpack.c.b16 %v408, %v407
    %v429 = vpack.c.b16 %v410, %v409
    %v430 = vpack.c.b16 %v412, %v411
    %v431 = vpack.c.b16 %v414, %v413
    %v432 = vpack.c.b16 %v416, %v415
    %449 = vmatprep.subr.bf16.mxu0 0
    %450 = vmatpush1.bf16.msra.mxu0 %v417
    %451 = vmatprep.subr.bf16.mxu0 0
    %452 = vmatpush1.bf16.msra.mxu0 %v418
    %453 = vmatprep.subr.bf16.mxu0 0
    %454 = vmatpush1.bf16.msra.mxu0 %v419
    %455 = vmatprep.subr.bf16.mxu0 0
    %456 = vmatpush1.bf16.msra.mxu0 %v420
    %457 = vmatprep.subr.bf16.mxu0 0
    %458 = vmatpush1.bf16.msra.mxu0 %v421
    %459 = vmatprep.subr.bf16.mxu0 0
    %460 = vmatpush1.bf16.msra.mxu0 %v422
    %461 = vmatprep.subr.bf16.mxu0 0
    %462 = vmatpush1.bf16.msra.mxu0 %v423
    %463 = vmatprep.subr.bf16.mxu0 0
    %464 = vmatpush1.bf16.msra.mxu0 %v424
    %465 = vmatprep.subr.bf16.mxu0 0
    %466 = vmatpush1.bf16.msra.mxu0 %v425
    %467 = vmatprep.subr.bf16.mxu0 0
    %468 = vmatpush1.bf16.msra.mxu0 %v426
    %469 = vmatprep.subr.bf16.mxu0 0
    %470 = vmatpush1.bf16.msra.mxu0 %v427
    %471 = vmatprep.subr.bf16.mxu0 0
    %472 = vmatpush1.bf16.msra.mxu0 %v428
    %473 = vmatprep.subr.bf16.mxu0 0
    %474 = vmatpush1.bf16.msra.mxu0 %v429
    %475 = vmatprep.subr.bf16.mxu0 0
    %476 = vmatpush1.bf16.msra.mxu0 %v430
    %477 = vmatprep.subr.bf16.mxu0 0
    %478 = vmatpush1.bf16.msra.mxu0 %v431
    %479 = vmatprep.subr.bf16.mxu0 0
    %480 = vmatpush1.bf16.msra.mxu0 %v432
    %481 = vmatprep.mubr.bf16.mxu0 %v290
    %482 = vmatmul.mubr.bf16.gmra.mrb[0].mxu0 %v289
    %v483 = vpop.f32.mrb[0].mxu0
    %v484 = vadd.f32 0.0, %v483
    %v485 = vpop.f32.mrb[0].mxu0
    %v486 = vpop.f32.mrb[0].mxu0
    %v487 = vadd.f32 0.0, %v486
    %v488 = vpop.f32.mrb[0].mxu0
    %489 = vmatprep.mubr.bf16.mxu0 %v292
    %490 = vmatmul.mubr.bf16.gmra.mrb[0].mxu0 %v291
    %v491 = vpop.f32.mrb[0].mxu0
    %v492 = vadd.f32 0.0, %v491
    %v493 = vpop.f32.mrb[0].mxu0
    %v494 = vpop.f32.mrb[0].mxu0
    %v495 = vadd.f32 0.0, %v494
    %v496 = vpop.f32.mrb[0].mxu0
    %497 = vmatprep.mubr.bf16.mxu0 %v294
    %498 = vmatmul.mubr.bf16.gmra.mrb[0].mxu0 %v293
    %v499 = vpop.f32.mrb[0].mxu0
    %v500 = vadd.f32 0.0, %v499
    %v501 = vpop.f32.mrb[0].mxu0
    %v502 = vpop.f32.mrb[0].mxu0
    %v503 = vadd.f32 0.0, %v502
    %v504 = vpop.f32.mrb[0].mxu0
    %505 = vmatprep.mubr.bf16.mxu0 %v296
    %506 = vmatmul.mubr.bf16.gmra.mrb[0].mxu0 %v295
    %v507 = vpop.f32.mrb[0].mxu0
    %v508 = vadd.f32 0.0, %v507
    %v509 = vpop.f32.mrb[0].mxu0
    %v510 = vpop.f32.mrb[0].mxu0
    %v511 = vadd.f32 0.0, %v510
    %v512 = vpop.f32.mrb[0].mxu0
    %513 = vmatprep.mubr.bf16.mxu0 %v298
    %514 = vmatmul.mubr.bf16.gmra.mrb[0].mxu0 %v297
    %v515 = vpop.f32.mrb[0].mxu0
    %v516 = vadd.f32 0.0, %v515
    %v517 = vpop.f32.mrb[0].mxu0
    %v518 = vpop.f32.mrb[0].mxu0
    %v519 = vadd.f32 0.0, %v518
    %v520 = vpop.f32.mrb[0].mxu0
    %521 = vmatprep.mubr.bf16.mxu0 %v300
    %522 = vmatmul.mubr.bf16.gmra.mrb[0].mxu0 %v299
    %v523 = vpop.f32.mrb[0].mxu0
    %v524 = vadd.f32 0.0, %v523
    %v525 = vpop.f32.mrb[0].mxu0
    %v526 = vpop.f32.mrb[0].mxu0
    %v527 = vadd.f32 0.0, %v526
    %v528 = vpop.f32.mrb[0].mxu0
    %529 = vmatprep.mubr.bf16.mxu0 %v302
    %530 = vmatmul.mubr.bf16.gmra.mrb[0].mxu0 %v301
    %v531 = vpop.f32.mrb[0].mxu0
    %v532 = vadd.f32 0.0, %v531
    %v533 = vpop.f32.mrb[0].mxu0
    %v534 = vpop.f32.mrb[0].mxu0
    %v535 = vadd.f32 0.0, %v534
    %v536 = vpop.f32.mrb[0].mxu0
    %537 = vmatprep.mubr.bf16.mxu0 %v304
    %538 = vmatmul.mubr.bf16.gmra.mrb[0].mxu0 %v303
    %v539 = vpop.f32.mrb[0].mxu0
    %v540 = vadd.f32 0.0, %v539
    %v541 = vpop.f32.mrb[0].mxu0
    %v542 = vpop.f32.mrb[0].mxu0
    %v543 = vadd.f32 0.0, %v542
    %v544 = vpop.f32.mrb[0].mxu0
    %545 = vmatprep.mubr.bf16.mxu0 %v306
    %546 = vmatmul.mubr.bf16.gmra.mrb[0].mxu0 %v305
    %v547 = vpop.f32.mrb[0].mxu0
    %v548 = vadd.f32 0.0, %v547
    %v549 = vpop.f32.mrb[0].mxu0
    %v550 = vpop.f32.mrb[0].mxu0
    %v551 = vadd.f32 0.0, %v550
    %v552 = vpop.f32.mrb[0].mxu0
    %553 = vmatprep.mubr.bf16.mxu0 %v308
    %554 = vmatmul.mubr.bf16.gmra.mrb[0].mxu0 %v307
    %v555 = vpop.f32.mrb[0].mxu0
    %v556 = vadd.f32 0.0, %v555
    %v557 = vpop.f32.mrb[0].mxu0
    %v558 = vpop.f32.mrb[0].mxu0
    %v559 = vadd.f32 0.0, %v558
    %v560 = vpop.f32.mrb[0].mxu0
    %561 = vmatprep.mubr.bf16.mxu0 %v310
    %562 = vmatmul.mubr.bf16.gmra.mrb[0].mxu0 %v309
    %v563 = vpop.f32.mrb[0].mxu0
    %v564 = vadd.f32 0.0, %v563
    %v565 = vpop.f32.mrb[0].mxu0
    %v566 = vpop.f32.mrb[0].mxu0
    %v567 = vadd.f32 0.0, %v566
    %v568 = vpop.f32.mrb[0].mxu0
    %569 = vmatprep.mubr.bf16.mxu0 %v312
    %570 = vmatmul.mubr.bf16.gmra.mrb[0].mxu0 %v311
    %v571 = vpop.f32.mrb[0].mxu0
    %v572 = vadd.f32 0.0, %v571
    %v573 = vpop.f32.mrb[0].mxu0
    %v574 = vpop.f32.mrb[0].mxu0
    %v575 = vadd.f32 0.0, %v574
    %v576 = vpop.f32.mrb[0].mxu0
    %577 = vmatprep.mubr.bf16.mxu0 %v314
    %578 = vmatmul.mubr.bf16.gmra.mrb[0].mxu0 %v313
    %v579 = vpop.f32.mrb[0].mxu0
    %v580 = vadd.f32 0.0, %v579
    %v581 = vpop.f32.mrb[0].mxu0
    %v582 = vpop.f32.mrb[0].mxu0
    %v583 = vadd.f32 0.0, %v582
    %v584 = vpop.f32.mrb[0].mxu0
    %585 = vmatprep.mubr.bf16.mxu0 %v316
    %586 = vmatmul.mubr.bf16.gmra.mrb[0].mxu0 %v315
    %v587 = vpop.f32.mrb[0].mxu0
    %v588 = vadd.f32 0.0, %v587
    %v589 = vpop.f32.mrb[0].mxu0
    %v590 = vpop.f32.mrb[0].mxu0
    %v591 = vadd.f32 0.0, %v590
    %v592 = vpop.f32.mrb[0].mxu0
    %593 = vmatprep.mubr.bf16.mxu0 %v318
    %594 = vmatmul.mubr.bf16.gmra.mrb[0].mxu0 %v317
    %v595 = vpop.f32.mrb[0].mxu0
    %v596 = vadd.f32 0.0, %v595
    %v597 = vpop.f32.mrb[0].mxu0
    %v598 = vpop.f32.mrb[0].mxu0
    %v599 = vadd.f32 0.0, %v598
    %v600 = vpop.f32.mrb[0].mxu0
    %601 = vmatprep.mubr.bf16.mxu0 %v320
    %602 = vmatmul.mubr.bf16.gmra.mrb[0].mxu0 %v319
    %v603 = vpop.f32.mrb[0].mxu0
    %v604 = vadd.f32 0.0, %v603
    %v605 = vpop.f32.mrb[0].mxu0
    %v606 = vpop.f32.mrb[0].mxu0
    %v607 = vadd.f32 0.0, %v606
    %v608 = vpop.f32.mrb[0].mxu0
    %609 = vdwg.mxu0
    %v610 = vld [vmem:[#allocation2] sm:$0xff]
    %v611 = vld [vmem:[#allocation2 + $0x8] sm:$0xff]
    %v612 = vld [vmem:[#allocation2 + $0x10] sm:$0xff]
    %v613 = vld [vmem:[#allocation2 + $0x18] sm:$0xff]
    %v614 = vld [vmem:[#allocation2 + $0x20] sm:$0xff]
    %v615 = vld [vmem:[#allocation2 + $0x28] sm:$0xff]
    %v616 = vld [vmem:[#allocation2 + $0x30] sm:$0xff]
    %v617 = vld [vmem:[#allocation2 + $0x38] sm:$0xff]
    %v618 = vld [vmem:[#allocation2 + $0x40] sm:$0xff]
    %v619 = vld [vmem:[#allocation2 + $0x48] sm:$0xff]
    %v620 = vld [vmem:[#allocation2 + $0x50] sm:$0xff]
    %v621 = vld [vmem:[#allocation2 + $0x58] sm:$0xff]
    %v622 = vld [vmem:[#allocation2 + $0x60] sm:$0xff]
    %v623 = vld [vmem:[#allocation2 + $0x68] sm:$0xff]
    %v624 = vld [vmem:[#allocation2 + $0x70] sm:$0xff]
    %v625 = vld [vmem:[#allocation2 + $0x78] sm:$0xff]
    %v626 = vld [vmem:[#allocation2 + $0x80] sm:$0xff]
    %v627 = vld [vmem:[#allocation2 + $0x88] sm:$0xff]
    %v628 = vld [vmem:[#allocation2 + $0x90] sm:$0xff]
    %v629 = vld [vmem:[#allocation2 + $0x98] sm:$0xff]
    %v630 = vld [vmem:[#allocation2 + $0xa0] sm:$0xff]
    %v631 = vld [vmem:[#allocation2 + $0xa8] sm:$0xff]
    %v632 = vld [vmem:[#allocation2 + $0xb0] sm:$0xff]
    %v633 = vld [vmem:[#allocation2 + $0xb8] sm:$0xff]
    %v634 = vld [vmem:[#allocation2 + $0xc0] sm:$0xff]
    %v635 = vld [vmem:[#allocation2 + $0xc8] sm:$0xff]
    %v636 = vld [vmem:[#allocation2 + $0xd0] sm:$0xff]
    %v637 = vld [vmem:[#allocation2 + $0xd8] sm:$0xff]
    %v638 = vld [vmem:[#allocation2 + $0xe0] sm:$0xff]
    %v639 = vld [vmem:[#allocation2 + $0xe8] sm:$0xff]
    %v640 = vld [vmem:[#allocation2 + $0xf0] sm:$0xff]
    %v641 = vld [vmem:[#allocation2 + $0xf8] sm:$0xff]
    %v642 = vpack.c.bf16 %v487, %v484
    %v643 = vpack.c.bf16 %v495, %v492
    %v644 = vpack.c.bf16 %v503, %v500
    %v645 = vpack.c.bf16 %v511, %v508
    %v646 = vpack.c.bf16 %v519, %v516
    %v647 = vpack.c.bf16 %v527, %v524
    %v648 = vpack.c.bf16 %v535, %v532
    %v649 = vpack.c.bf16 %v543, %v540
    %v650 = vpack.c.bf16 %v551, %v548
    %v651 = vpack.c.bf16 %v559, %v556
    %v652 = vpack.c.bf16 %v567, %v564
    %v653 = vpack.c.bf16 %v575, %v572
    %v654 = vpack.c.bf16 %v583, %v580
    %v655 = vpack.c.bf16 %v591, %v588
    %v656 = vpack.c.bf16 %v599, %v596
    %v657 = vpack.c.bf16 %v607, %v604
    %v658 = vld [vmem:[#allocation9] sm:$0xf]
    %v659 = vld [vmem:[#allocation9 + $0x4] sm:$0xf]
    %v660 = vld [vmem:[#allocation9 + $0x8] sm:$0xf]
    %v661 = vld [vmem:[#allocation9 + $0xc] sm:$0xf]
    %v662 = vld [vmem:[#allocation9 + $0x10] sm:$0xf]
    %v663 = vld [vmem:[#allocation9 + $0x14] sm:$0xf]
    %v664 = vld [vmem:[#allocation9 + $0x18] sm:$0xf]
    %v665 = vld [vmem:[#allocation9 + $0x1c] sm:$0xf]
    %v666 = vld [vmem:[#allocation9 + $0x20] sm:$0xf]
    %v667 = vld [vmem:[#allocation9 + $0x24] sm:$0xf]
    %v668 = vld [vmem:[#allocation9 + $0x28] sm:$0xf]
    %v669 = vld [vmem:[#allocation9 + $0x2c] sm:$0xf]
    %v670 = vld [vmem:[#allocation9 + $0x30] sm:$0xf]
    %v671 = vld [vmem:[#allocation9 + $0x34] sm:$0xf]
    %v672 = vld [vmem:[#allocation9 + $0x38] sm:$0xf]
    %v673 = vld [vmem:[#allocation9 + $0x3c] sm:$0xf]
    %v690 = vunpack.c.l.b16 %v658
    %v691 = vunpack.c.l.b16 %v659
    %v692 = vunpack.c.l.b16 %v660
    %v693 = vunpack.c.l.b16 %v661
    %v694 = vunpack.c.l.b16 %v662
    %v695 = vunpack.c.l.b16 %v663
    %v696 = vunpack.c.l.b16 %v664
    %v697 = vunpack.c.l.b16 %v665
    %v698 = vunpack.c.l.b16 %v666
    %v699 = vunpack.c.l.b16 %v667
    %v700 = vunpack.c.l.b16 %v668
    %v701 = vunpack.c.l.b16 %v669
    %v702 = vunpack.c.l.b16 %v670
    %v703 = vunpack.c.l.b16 %v671
    %v704 = vunpack.c.l.b16 %v672
    %v705 = vunpack.c.l.b16 %v673
    %v706 = vpack.c.b16 %v691, %v690
    %v707 = vpack.c.b16 %v693, %v692
    %v708 = vpack.c.b16 %v695, %v694
    %v709 = vpack.c.b16 %v697, %v696
    %v710 = vpack.c.b16 %v699, %v698
    %v711 = vpack.c.b16 %v701, %v700
    %v712 = vpack.c.b16 %v703, %v702
    %v713 = vpack.c.b16 %v705, %v704
    %722 = vmatprep.subr.bf16.mxu0 0
    %723 = vmatpush1.bf16.msra.mxu0 %v706
    %724 = vmatprep.subr.bf16.mxu0 0
    %725 = vmatpush1.bf16.msra.mxu0 %v707
    %726 = vmatprep.subr.bf16.mxu0 0
    %727 = vmatpush1.bf16.msra.mxu0 %v708
    %728 = vmatprep.subr.bf16.mxu0 0
    %729 = vmatpush1.bf16.msra.mxu0 %v709
    %730 = vmatprep.subr.bf16.mxu0 0
    %731 = vmatpush1.bf16.msra.mxu0 %v710
    %732 = vmatprep.subr.bf16.mxu0 0
    %733 = vmatpush1.bf16.msra.mxu0 %v711
    %734 = vmatprep.subr.bf16.mxu0 0
    %735 = vmatpush1.bf16.msra.mxu0 %v712
    %736 = vmatprep.subr.bf16.mxu0 0
    %737 = vmatpush1.bf16.msra.mxu0 %v713
    %738 = vmatprep.subr.bf16.mxu0 0
    %739 = vmatpush1.bf16.msra.mxu0 0
    %740 = vmatprep.subr.bf16.mxu0 0
    %741 = vmatpush1.bf16.msra.mxu0 0
    %742 = vmatprep.subr.bf16.mxu0 0
    %743 = vmatpush1.bf16.msra.mxu0 0
    %744 = vmatprep.subr.bf16.mxu0 0
    %745 = vmatpush1.bf16.msra.mxu0 0
    %746 = vmatprep.subr.bf16.mxu0 0
    %747 = vmatpush1.bf16.msra.mxu0 0
    %748 = vmatprep.subr.bf16.mxu0 0
    %749 = vmatpush1.bf16.msra.mxu0 0
    %750 = vmatprep.subr.bf16.mxu0 0
    %751 = vmatpush1.bf16.msra.mxu0 0
    %752 = vmatprep.subr.bf16.mxu0 0
    %753 = vmatpush1.bf16.msra.mxu0 0
    %754 = vmatprep.mubr.bf16.mxu0 0
    %755 = vmatmul.mubr.bf16.gmra.mrb[0].mxu0 %v642
    %v756 = vpop.f32.mrb[0].mxu0
    %v757 = vadd.f32 0.0, %v756
    %v758 = vpop.f32.mrb[0].mxu0
    %v759 = vpop.f32.mrb[0].mxu0
    %v760 = vadd.f32 0.0, %v759
    %v761 = vpop.f32.mrb[0].mxu0
    %762 = vmatprep.mubr.bf16.mxu0 0
    %763 = vmatmul.mubr.bf16.gmra.mrb[0].mxu0 %v643
    %v764 = vpop.f32.mrb[0].mxu0
    %v765 = vadd.f32 0.0, %v764
    %v766 = vpop.f32.mrb[0].mxu0
    %v767 = vpop.f32.mrb[0].mxu0
    %v768 = vadd.f32 0.0, %v767
    %v769 = vpop.f32.mrb[0].mxu0
    %770 = vmatprep.mubr.bf16.mxu0 0
    %771 = vmatmul.mubr.bf16.gmra.mrb[0].mxu0 %v644
    %v772 = vpop.f32.mrb[0].mxu0
    %v773 = vadd.f32 0.0, %v772
    %v774 = vpop.f32.mrb[0].mxu0
    %v775 = vpop.f32.mrb[0].mxu0
    %v776 = vadd.f32 0.0, %v775
    %v777 = vpop.f32.mrb[0].mxu0
    %778 = vmatprep.mubr.bf16.mxu0 0
    %779 = vmatmul.mubr.bf16.gmra.mrb[0].mxu0 %v645
    %v780 = vpop.f32.mrb[0].mxu0
    %v781 = vadd.f32 0.0, %v780
    %v782 = vpop.f32.mrb[0].mxu0
    %v783 = vpop.f32.mrb[0].mxu0
    %v784 = vadd.f32 0.0, %v783
    %v785 = vpop.f32.mrb[0].mxu0
    %786 = vmatprep.mubr.bf16.mxu0 0
    %787 = vmatmul.mubr.bf16.gmra.mrb[0].mxu0 %v646
    %v788 = vpop.f32.mrb[0].mxu0
    %v789 = vadd.f32 0.0, %v788
    %v790 = vpop.f32.mrb[0].mxu0
    %v791 = vpop.f32.mrb[0].mxu0
    %v792 = vadd.f32 0.0, %v791
    %v793 = vpop.f32.mrb[0].mxu0
    %794 = vmatprep.mubr.bf16.mxu0 0
    %795 = vmatmul.mubr.bf16.gmra.mrb[0].mxu0 %v647
    %v796 = vpop.f32.mrb[0].mxu0
    %v797 = vadd.f32 0.0, %v796
    %v798 = vpop.f32.mrb[0].mxu0
    %v799 = vpop.f32.mrb[0].mxu0
    %v800 = vadd.f32 0.0, %v799
    %v801 = vpop.f32.mrb[0].mxu0
    %802 = vmatprep.mubr.bf16.mxu0 0
    %803 = vmatmul.mubr.bf16.gmra.mrb[0].mxu0 %v648
    %v804 = vpop.f32.mrb[0].mxu0
    %v805 = vadd.f32 0.0, %v804
    %v806 = vpop.f32.mrb[0].mxu0
    %v807 = vpop.f32.mrb[0].mxu0
    %v808 = vadd.f32 0.0, %v807
    %v809 = vpop.f32.mrb[0].mxu0
    %810 = vmatprep.mubr.bf16.mxu0 0
    %811 = vmatmul.mubr.bf16.gmra.mrb[0].mxu0 %v649
    %v812 = vpop.f32.mrb[0].mxu0
    %v813 = vadd.f32 0.0, %v812
    %v814 = vpop.f32.mrb[0].mxu0
    %v815 = vpop.f32.mrb[0].mxu0
    %v816 = vadd.f32 0.0, %v815
    %v817 = vpop.f32.mrb[0].mxu0
    %818 = vmatprep.mubr.bf16.mxu0 0
    %819 = vmatmul.mubr.bf16.gmra.mrb[0].mxu0 %v650
    %v820 = vpop.f32.mrb[0].mxu0
    %v821 = vadd.f32 0.0, %v820
    %v822 = vpop.f32.mrb[0].mxu0
    %v823 = vpop.f32.mrb[0].mxu0
    %v824 = vadd.f32 0.0, %v823
    %v825 = vpop.f32.mrb[0].mxu0
    %826 = vmatprep.mubr.bf16.mxu0 0
    %827 = vmatmul.mubr.bf16.gmra.mrb[0].mxu0 %v651
    %v828 = vpop.f32.mrb[0].mxu0
    %v829 = vadd.f32 0.0, %v828
    %v830 = vpop.f32.mrb[0].mxu0
    %v831 = vpop.f32.mrb[0].mxu0
    %v832 = vadd.f32 0.0, %v831
    %v833 = vpop.f32.mrb[0].mxu0
    %834 = vmatprep.mubr.bf16.mxu0 0
    %835 = vmatmul.mubr.bf16.gmra.mrb[0].mxu0 %v652
    %v836 = vpop.f32.mrb[0].mxu0
    %v837 = vadd.f32 0.0, %v836
    %v838 = vpop.f32.mrb[0].mxu0
    %v839 = vpop.f32.mrb[0].mxu0
    %v840 = vadd.f32 0.0, %v839
    %v841 = vpop.f32.mrb[0].mxu0
    %842 = vmatprep.mubr.bf16.mxu0 0
    %843 = vmatmul.mubr.bf16.gmra.mrb[0].mxu0 %v653
    %v844 = vpop.f32.mrb[0].mxu0
    %v845 = vadd.f32 0.0, %v844
    %v846 = vpop.f32.mrb[0].mxu0
    %v847 = vpop.f32.mrb[0].mxu0
    %v848 = vadd.f32 0.0, %v847
    %v849 = vpop.f32.mrb[0].mxu0
    %850 = vmatprep.mubr.bf16.mxu0 0
    %851 = vmatmul.mubr.bf16.gmra.mrb[0].mxu0 %v654
    %v852 = vpop.f32.mrb[0].mxu0
    %v853 = vadd.f32 0.0, %v852
    %v854 = vpop.f32.mrb[0].mxu0
    %v855 = vpop.f32.mrb[0].mxu0
    %v856 = vadd.f32 0.0, %v855
    %v857 = vpop.f32.mrb[0].mxu0
    %858 = vmatprep.mubr.bf16.mxu0 0
    %859 = vmatmul.mubr.bf16.gmra.mrb[0].mxu0 %v655
    %v860 = vpop.f32.mrb[0].mxu0
    %v861 = vadd.f32 0.0, %v860
    %v862 = vpop.f32.mrb[0].mxu0
    %v863 = vpop.f32.mrb[0].mxu0
    %v864 = vadd.f32 0.0, %v863
    %v865 = vpop.f32.mrb[0].mxu0
    %866 = vmatprep.mubr.bf16.mxu0 0
    %867 = vmatmul.mubr.bf16.gmra.mrb[0].mxu0 %v656
    %v868 = vpop.f32.mrb[0].mxu0
    %v869 = vadd.f32 0.0, %v868
    %v870 = vpop.f32.mrb[0].mxu0
    %v871 = vpop.f32.mrb[0].mxu0
    %v872 = vadd.f32 0.0, %v871
    %v873 = vpop.f32.mrb[0].mxu0
    %874 = vmatprep.mubr.bf16.mxu0 0
    %875 = vmatmul.mubr.bf16.gmra.mrb[0].mxu0 %v657
    %v876 = vpop.f32.mrb[0].mxu0
    %v877 = vadd.f32 0.0, %v876
    %v878 = vpop.f32.mrb[0].mxu0
    %v879 = vpop.f32.mrb[0].mxu0
    %v880 = vadd.f32 0.0, %v879
    %v881 = vpop.f32.mrb[0].mxu0
    %882 = vdwg.mxu0
    %v883 = vadd.f32 %v610, %v757
    %v884 = vadd.f32 %v611, %v760
    %v885 = vadd.f32 %v612, %v765
    %v886 = vadd.f32 %v613, %v768
    %v887 = vadd.f32 %v614, %v773
    %v888 = vadd.f32 %v615, %v776
    %v889 = vadd.f32 %v616, %v781
    %v890 = vadd.f32 %v617, %v784
    %v891 = vadd.f32 %v618, %v789
    %v892 = vadd.f32 %v619, %v792
    %v893 = vadd.f32 %v620, %v797
    %v894 = vadd.f32 %v621, %v800
    %v895 = vadd.f32 %v622, %v805
    %v896 = vadd.f32 %v623, %v808
    %v897 = vadd.f32 %v624, %v813
    %v898 = vadd.f32 %v625, %v816
    %v899 = vadd.f32 %v626, %v821
    %v900 = vadd.f32 %v627, %v824
    %v901 = vadd.f32 %v628, %v829
    %v902 = vadd.f32 %v629, %v832
    %v903 = vadd.f32 %v630, %v837
    %v904 = vadd.f32 %v631, %v840
    %v905 = vadd.f32 %v632, %v845
    %v906 = vadd.f32 %v633, %v848
    %v907 = vadd.f32 %v634, %v853
    %v908 = vadd.f32 %v635, %v856
    %v909 = vadd.f32 %v636, %v861
    %v910 = vadd.f32 %v637, %v864
    %v911 = vadd.f32 %v638, %v869
    %v912 = vadd.f32 %v639, %v872
    %v913 = vadd.f32 %v640, %v877
    %v914 = vadd.f32 %v641, %v880
    %915 = vst [vmem:[#allocation2] sm:$0xff] %v883
    %916 = vst [vmem:[#allocation2 + $0x8] sm:$0xff] %v884
    %917 = vst [vmem:[#allocation2 + $0x10] sm:$0xff] %v885
    %918 = vst [vmem:[#allocation2 + $0x18] sm:$0xff] %v886
    %919 = vst [vmem:[#allocation2 + $0x20] sm:$0xff] %v887
    %920 = vst [vmem:[#allocation2 + $0x28] sm:$0xff] %v888
    %921 = vst [vmem:[#allocation2 + $0x30] sm:$0xff] %v889
    %922 = vst [vmem:[#allocation2 + $0x38] sm:$0xff] %v890
    %923 = vst [vmem:[#allocation2 + $0x40] sm:$0xff] %v891
    %924 = vst [vmem:[#allocation2 + $0x48] sm:$0xff] %v892
    %925 = vst [vmem:[#allocation2 + $0x50] sm:$0xff] %v893
    %926 = vst [vmem:[#allocation2 + $0x58] sm:$0xff] %v894
    %927 = vst [vmem:[#allocation2 + $0x60] sm:$0xff] %v895
    %928 = vst [vmem:[#allocation2 + $0x68] sm:$0xff] %v896
    %929 = vst [vmem:[#allocation2 + $0x70] sm:$0xff] %v897
    %930 = vst [vmem:[#allocation2 + $0x78] sm:$0xff] %v898
    %931 = vst [vmem:[#allocation2 + $0x80] sm:$0xff] %v899
    %932 = vst [vmem:[#allocation2 + $0x88] sm:$0xff] %v900
    %933 = vst [vmem:[#allocation2 + $0x90] sm:$0xff] %v901
    %934 = vst [vmem:[#allocation2 + $0x98] sm:$0xff] %v902
    %935 = vst [vmem:[#allocation2 + $0xa0] sm:$0xff] %v903
    %936 = vst [vmem:[#allocation2 + $0xa8] sm:$0xff] %v904
    %937 = vst [vmem:[#allocation2 + $0xb0] sm:$0xff] %v905
    %938 = vst [vmem:[#allocation2 + $0xb8] sm:$0xff] %v906
    %939 = vst [vmem:[#allocation2 + $0xc0] sm:$0xff] %v907
    %940 = vst [vmem:[#allocation2 + $0xc8] sm:$0xff] %v908
    %941 = vst [vmem:[#allocation2 + $0xd0] sm:$0xff] %v909
    %942 = vst [vmem:[#allocation2 + $0xd8] sm:$0xff] %v910
    %943 = vst [vmem:[#allocation2 + $0xe0] sm:$0xff] %v911
    %944 = vst [vmem:[#allocation2 + $0xe8] sm:$0xff] %v912
    %945 = vst [vmem:[#allocation2 + $0xf0] sm:$0xff] %v913
    %946 = vst [vmem:[#allocation2 + $0xf8] sm:$0xff] %v914
    // Predicated region
    $region50: #{tpu_custom_call.1} parent=1 // pred_check
      %p947 = pneg %p93
    $region51: #{tpu_custom_call.1} parent=1 // pred_check_branch
      %949 = sbr.rel (%p947) target = $region53
    $region52: #{tpu_custom_call.1} parent=1 // pred_region
      %v950 = vld [vmem:[#allocation2] sm:$0xff]
      %v951 = vld [vmem:[#allocation2 + $0x8] sm:$0xff]
      %v952 = vld [vmem:[#allocation2 + $0x10] sm:$0xff]
      %v953 = vld [vmem:[#allocation2 + $0x18] sm:$0xff]
      %v954 = vld [vmem:[#allocation2 + $0x20] sm:$0xff]
      %v955 = vld [vmem:[#allocation2 + $0x28] sm:$0xff]
      %v956 = vld [vmem:[#allocation2 + $0x30] sm:$0xff]
      %v957 = vld [vmem:[#allocation2 + $0x38] sm:$0xff]
      %v958 = vld [vmem:[#allocation2 + $0x40] sm:$0xff]
      %v959 = vld [vmem:[#allocation2 + $0x48] sm:$0xff]
      %v960 = vld [vmem:[#allocation2 + $0x50] sm:$0xff]
      %v961 = vld [vmem:[#allocation2 + $0x58] sm:$0xff]
      %v962 = vld [vmem:[#allocation2 + $0x60] sm:$0xff]
      %v963 = vld [vmem:[#allocation2 + $0x68] sm:$0xff]
      %v964 = vld [vmem:[#allocation2 + $0x70] sm:$0xff]
      %v965 = vld [vmem:[#allocation2 + $0x78] sm:$0xff]
      %v966 = vld [vmem:[#allocation2 + $0x80] sm:$0xff]
      %v967 = vld [vmem:[#allocation2 + $0x88] sm:$0xff]
      %v968 = vld [vmem:[#allocation2 + $0x90] sm:$0xff]
      %v969 = vld [vmem:[#allocation2 + $0x98] sm:$0xff]
      %v970 = vld [vmem:[#allocation2 + $0xa0] sm:$0xff]
      %v971 = vld [vmem:[#allocation2 + $0xa8] sm:$0xff]
      %v972 = vld [vmem:[#allocation2 + $0xb0] sm:$0xff]
      %v973 = vld [vmem:[#allocation2 + $0xb8] sm:$0xff]
      %v974 = vld [vmem:[#allocation2 + $0xc0] sm:$0xff]
      %v975 = vld [vmem:[#allocation2 + $0xc8] sm:$0xff]
      %v976 = vld [vmem:[#allocation2 + $0xd0] sm:$0xff]
      %v977 = vld [vmem:[#allocation2 + $0xd8] sm:$0xff]
      %v978 = vld [vmem:[#allocation2 + $0xe0] sm:$0xff]
      %v979 = vld [vmem:[#allocation2 + $0xe8] sm:$0xff]
      %v980 = vld [vmem:[#allocation2 + $0xf0] sm:$0xff]
      %v981 = vld [vmem:[#allocation2 + $0xf8] sm:$0xff]
      %v982 = vld [vmem:[%s4] sm:$0x1]
      %v984 = vlaneseq
      %v985 = vshrl.u32 %v984, 7
      %v986 = vsub.s32 0, %v985
      %v987 = vrot.slane %v982, %v986
      %v989 = vadd.f32 %v950, %v987
      %v990 = vadd.f32 %v951, %v987
      %v991 = vadd.f32 %v952, %v987
      %v992 = vadd.f32 %v953, %v987
      %v993 = vadd.f32 %v954, %v987
      %v994 = vadd.f32 %v955, %v987
      %v995 = vadd.f32 %v956, %v987
      %v996 = vadd.f32 %v957, %v987
      %v997 = vadd.f32 %v958, %v987
      %v998 = vadd.f32 %v959, %v987
      %v999 = vadd.f32 %v960, %v987
      %v1000 = vadd.f32 %v961, %v987
      %v1001 = vadd.f32 %v962, %v987
      %v1002 = vadd.f32 %v963, %v987
      %v1003 = vadd.f32 %v964, %v987
      %v1004 = vadd.f32 %v965, %v987
      %v1005 = vadd.f32 %v966, %v987
      %v1006 = vadd.f32 %v967, %v987
      %v1007 = vadd.f32 %v968, %v987
      %v1008 = vadd.f32 %v969, %v987
      %v1009 = vadd.f32 %v970, %v987
      %v1010 = vadd.f32 %v971, %v987
      %v1011 = vadd.f32 %v972, %v987
      %v1012 = vadd.f32 %v973, %v987
      %v1013 = vadd.f32 %v974, %v987
      %v1014 = vadd.f32 %v975, %v987
      %v1015 = vadd.f32 %v976, %v987
      %v1016 = vadd.f32 %v977, %v987
      %v1017 = vadd.f32 %v978, %v987
      %v1018 = vadd.f32 %v979, %v987
      %v1019 = vadd.f32 %v980, %v987
      %v1020 = vadd.f32 %v981, %v987
      %v1021 = vld [vmem:[#allocation8] sm:$0xf]
      %v1022 = vld [vmem:[#allocation8 + $0x4] sm:$0xf]
      %v1023 = vld [vmem:[#allocation8 + $0x8] sm:$0xf]
      %v1024 = vld [vmem:[#allocation8 + $0xc] sm:$0xf]
      %v1025 = vld [vmem:[#allocation8 + $0x10] sm:$0xf]
      %v1026 = vld [vmem:[#allocation8 + $0x14] sm:$0xf]
      %v1027 = vld [vmem:[#allocation8 + $0x18] sm:$0xf]
      %v1028 = vld [vmem:[#allocation8 + $0x1c] sm:$0xf]
      %v1029 = vld [vmem:[#allocation8 + $0x20] sm:$0xf]
      %v1030 = vld [vmem:[#allocation8 + $0x24] sm:$0xf]
      %v1031 = vld [vmem:[#allocation8 + $0x28] sm:$0xf]
      %v1032 = vld [vmem:[#allocation8 + $0x2c] sm:$0xf]
      %v1033 = vld [vmem:[#allocation8 + $0x30] sm:$0xf]
      %v1034 = vld [vmem:[#allocation8 + $0x34] sm:$0xf]
      %v1035 = vld [vmem:[#allocation8 + $0x38] sm:$0xf]
      %v1036 = vld [vmem:[#allocation8 + $0x3c] sm:$0xf]
      %v1037 = vld [vmem:[#allocation8 + $0x40] sm:$0xf]
      %v1038 = vld [vmem:[#allocation8 + $0x44] sm:$0xf]
      %v1039 = vld [vmem:[#allocation8 + $0x48] sm:$0xf]
      %v1040 = vld [vmem:[#allocation8 + $0x4c] sm:$0xf]
      %v1041 = vld [vmem:[#allocation8 + $0x50] sm:$0xf]
      %v1042 = vld [vmem:[#allocation8 + $0x54] sm:$0xf]
      %v1043 = vld [vmem:[#allocation8 + $0x58] sm:$0xf]
      %v1044 = vld [vmem:[#allocation8 + $0x5c] sm:$0xf]
      %v1045 = vld [vmem:[#allocation8 + $0x60] sm:$0xf]
      %v1046 = vld [vmem:[#allocation8 + $0x64] sm:$0xf]
      %v1047 = vld [vmem:[#allocation8 + $0x68] sm:$0xf]
      %v1048 = vld [vmem:[#allocation8 + $0x6c] sm:$0xf]
      %v1049 = vld [vmem:[#allocation8 + $0x70] sm:$0xf]
      %v1050 = vld [vmem:[#allocation8 + $0x74] sm:$0xf]
      %v1051 = vld [vmem:[#allocation8 + $0x78] sm:$0xf]
      %v1052 = vld [vmem:[#allocation8 + $0x7c] sm:$0xf]
      %v1053 = vld [vmem:[#allocation11] sm:$0xf]
      %v1054 = vld [vmem:[#allocation11 + $0x4] sm:$0xf]
      %v1055 = vld [vmem:[#allocation11 + $0x8] sm:$0xf]
      %v1056 = vld [vmem:[#allocation11 + $0xc] sm:$0xf]
      %v1057 = vld [vmem:[#allocation11 + $0x10] sm:$0xf]
      %v1058 = vld [vmem:[#allocation11 + $0x14] sm:$0xf]
      %v1059 = vld [vmem:[#allocation11 + $0x18] sm:$0xf]
      %v1060 = vld [vmem:[#allocation11 + $0x1c] sm:$0xf]
      %v1061 = vld [vmem:[#allocation11 + $0x20] sm:$0xf]
      %v1062 = vld [vmem:[#allocation11 + $0x24] sm:$0xf]
      %v1063 = vld [vmem:[#allocation11 + $0x28] sm:$0xf]
      %v1064 = vld [vmem:[#allocation11 + $0x2c] sm:$0xf]
      %v1065 = vld [vmem:[#allocation11 + $0x30] sm:$0xf]
      %v1066 = vld [vmem:[#allocation11 + $0x34] sm:$0xf]
      %v1067 = vld [vmem:[#allocation11 + $0x38] sm:$0xf]
      %v1068 = vld [vmem:[#allocation11 + $0x3c] sm:$0xf]
      %v1101 = vunpack.c.l.b16 %v1021
      %v1102 = vunpack.c.l.b16 %v1022
      %v1103 = vunpack.c.l.b16 %v1023
      %v1104 = vunpack.c.l.b16 %v1024
      %v1105 = vunpack.c.l.b16 %v1025
      %v1106 = vunpack.c.l.b16 %v1026
      %v1107 = vunpack.c.l.b16 %v1027
      %v1108 = vunpack.c.l.b16 %v1028
      %v1109 = vunpack.c.l.b16 %v1029
      %v1110 = vunpack.c.l.b16 %v1030
      %v1111 = vunpack.c.l.b16 %v1031
      %v1112 = vunpack.c.l.b16 %v1032
      %v1113 = vunpack.c.l.b16 %v1033
      %v1114 = vunpack.c.l.b16 %v1034
      %v1115 = vunpack.c.l.b16 %v1035
      %v1116 = vunpack.c.l.b16 %v1036
      %v1117 = vunpack.c.l.b16 %v1037
      %v1118 = vunpack.c.l.b16 %v1038
      %v1119 = vunpack.c.l.b16 %v1039
      %v1120 = vunpack.c.l.b16 %v1040
      %v1121 = vunpack.c.l.b16 %v1041
      %v1122 = vunpack.c.l.b16 %v1042
      %v1123 = vunpack.c.l.b16 %v1043
      %v1124 = vunpack.c.l.b16 %v1044
      %v1125 = vunpack.c.l.b16 %v1045
      %v1126 = vunpack.c.l.b16 %v1046
      %v1127 = vunpack.c.l.b16 %v1047
      %v1128 = vunpack.c.l.b16 %v1048
      %v1129 = vunpack.c.l.b16 %v1049
      %v1130 = vunpack.c.l.b16 %v1050
      %v1131 = vunpack.c.l.b16 %v1051
      %v1132 = vunpack.c.l.b16 %v1052
      %v1133 = vpack.c.b16 %v1102, %v1101
      %v1134 = vpack.c.b16 %v1104, %v1103
      %v1135 = vpack.c.b16 %v1106, %v1105
      %v1136 = vpack.c.b16 %v1108, %v1107
      %v1137 = vpack.c.b16 %v1110, %v1109
      %v1138 = vpack.c.b16 %v1112, %v1111
      %v1139 = vpack.c.b16 %v1114, %v1113
      %v1140 = vpack.c.b16 %v1116, %v1115
      %v1141 = vpack.c.b16 %v1118, %v1117
      %v1142 = vpack.c.b16 %v1120, %v1119
      %v1143 = vpack.c.b16 %v1122, %v1121
      %v1144 = vpack.c.b16 %v1124, %v1123
      %v1145 = vpack.c.b16 %v1126, %v1125
      %v1146 = vpack.c.b16 %v1128, %v1127
      %v1147 = vpack.c.b16 %v1130, %v1129
      %v1148 = vpack.c.b16 %v1132, %v1131
      %v1181 = vunpack.c.l.b16 %v1053
      %v1182 = vunpack.c.l.b16 %v1054
      %v1183 = vunpack.c.l.b16 %v1055
      %v1184 = vunpack.c.l.b16 %v1056
      %v1185 = vunpack.c.l.b16 %v1057
      %v1186 = vunpack.c.l.b16 %v1058
      %v1187 = vunpack.c.l.b16 %v1059
      %v1188 = vunpack.c.l.b16 %v1060
      %v1189 = vunpack.c.l.b16 %v1061
      %v1190 = vunpack.c.l.b16 %v1062
      %v1191 = vunpack.c.l.b16 %v1063
      %v1192 = vunpack.c.l.b16 %v1064
      %v1193 = vunpack.c.l.b16 %v1065
      %v1194 = vunpack.c.l.b16 %v1066
      %v1195 = vunpack.c.l.b16 %v1067
      %v1196 = vunpack.c.l.b16 %v1068
      %v1197 = vpack.c.b16 %v1182, %v1181
      %v1198 = vpack.c.b16 %v1184, %v1183
      %v1199 = vpack.c.b16 %v1186, %v1185
      %v1200 = vpack.c.b16 %v1188, %v1187
      %v1201 = vpack.c.b16 %v1190, %v1189
      %v1202 = vpack.c.b16 %v1192, %v1191
      %v1203 = vpack.c.b16 %v1194, %v1193
      %v1204 = vpack.c.b16 %v1196, %v1195
      %1213 = vmatprep.subr.bf16.mxu0 0
      %1214 = vmatpush1.bf16.msra.mxu0 %v1197
      %1215 = vmatprep.subr.bf16.mxu0 0
      %1216 = vmatpush1.bf16.msra.mxu0 %v1198
      %1217 = vmatprep.subr.bf16.mxu0 0
      %1218 = vmatpush1.bf16.msra.mxu0 %v1199
      %1219 = vmatprep.subr.bf16.mxu0 0
      %1220 = vmatpush1.bf16.msra.mxu0 %v1200
      %1221 = vmatprep.subr.bf16.mxu0 0
      %1222 = vmatpush1.bf16.msra.mxu0 %v1201
      %1223 = vmatprep.subr.bf16.mxu0 0
      %1224 = vmatpush1.bf16.msra.mxu0 %v1202
      %1225 = vmatprep.subr.bf16.mxu0 0
      %1226 = vmatpush1.bf16.msra.mxu0 %v1203
      %1227 = vmatprep.subr.bf16.mxu0 0
      %1228 = vmatpush1.bf16.msra.mxu0 %v1204
      %1229 = vmatprep.subr.bf16.mxu0 0
      %1230 = vmatpush1.bf16.msra.mxu0 0
      %1231 = vmatprep.subr.bf16.mxu0 0
      %1232 = vmatpush1.bf16.msra.mxu0 0
      %1233 = vmatprep.subr.bf16.mxu0 0
      %1234 = vmatpush1.bf16.msra.mxu0 0
      %1235 = vmatprep.subr.bf16.mxu0 0
      %1236 = vmatpush1.bf16.msra.mxu0 0
      %1237 = vmatprep.subr.bf16.mxu0 0
      %1238 = vmatpush1.bf16.msra.mxu0 0
      %1239 = vmatprep.subr.bf16.mxu0 0
      %1240 = vmatpush1.bf16.msra.mxu0 0
      %1241 = vmatprep.subr.bf16.mxu0 0
      %1242 = vmatpush1.bf16.msra.mxu0 0
      %1243 = vmatprep.subr.bf16.mxu0 0
      %1244 = vmatpush1.bf16.msra.mxu0 0
      %1245 = vmatprep.mubr.bf16.mxu0 0
      %1246 = vmatmul.mubr.bf16.gmra.mrb[0].mxu0 %v1133
      %v1247 = vpop.f32.mrb[0].mxu0
      %v1248 = vadd.f32 0.0, %v1247
      %v1249 = vpop.f32.mrb[0].mxu0
      %v1250 = vpop.f32.mrb[0].mxu0
      %v1251 = vadd.f32 0.0, %v1250
      %v1252 = vpop.f32.mrb[0].mxu0
      %1253 = vmatprep.mubr.bf16.mxu0 0
      %1254 = vmatmul.mubr.bf16.gmra.mrb[0].mxu0 %v1134
      %v1255 = vpop.f32.mrb[0].mxu0
      %v1256 = vadd.f32 0.0, %v1255
      %v1257 = vpop.f32.mrb[0].mxu0
      %v1258 = vpop.f32.mrb[0].mxu0
      %v1259 = vadd.f32 0.0, %v1258
      %v1260 = vpop.f32.mrb[0].mxu0
      %1261 = vmatprep.mubr.bf16.mxu0 0
      %1262 = vmatmul.mubr.bf16.gmra.mrb[0].mxu0 %v1135
      %v1263 = vpop.f32.mrb[0].mxu0
      %v1264 = vadd.f32 0.0, %v1263
      %v1265 = vpop.f32.mrb[0].mxu0
      %v1266 = vpop.f32.mrb[0].mxu0
      %v1267 = vadd.f32 0.0, %v1266
      %v1268 = vpop.f32.mrb[0].mxu0
      %1269 = vmatprep.mubr.bf16.mxu0 0
      %1270 = vmatmul.mubr.bf16.gmra.mrb[0].mxu0 %v1136
      %v1271 = vpop.f32.mrb[0].mxu0
      %v1272 = vadd.f32 0.0, %v1271
      %v1273 = vpop.f32.mrb[0].mxu0
      %v1274 = vpop.f32.mrb[0].mxu0
      %v1275 = vadd.f32 0.0, %v1274
      %v1276 = vpop.f32.mrb[0].mxu0
      %1277 = vmatprep.mubr.bf16.mxu0 0
      %1278 = vmatmul.mubr.bf16.gmra.mrb[0].mxu0 %v1137
      %v1279 = vpop.f32.mrb[0].mxu0
      %v1280 = vadd.f32 0.0, %v1279
      %v1281 = vpop.f32.mrb[0].mxu0
      %v1282 = vpop.f32.mrb[0].mxu0
      %v1283 = vadd.f32 0.0, %v1282
      %v1284 = vpop.f32.mrb[0].mxu0
      %1285 = vmatprep.mubr.bf16.mxu0 0
      %1286 = vmatmul.mubr.bf16.gmra.mrb[0].mxu0 %v1138
      %v1287 = vpop.f32.mrb[0].mxu0
      %v1288 = vadd.f32 0.0, %v1287
      %v1289 = vpop.f32.mrb[0].mxu0
      %v1290 = vpop.f32.mrb[0].mxu0
      %v1291 = vadd.f32 0.0, %v1290
      %v1292 = vpop.f32.mrb[0].mxu0
      %1293 = vmatprep.mubr.bf16.mxu0 0
      %1294 = vmatmul.mubr.bf16.gmra.mrb[0].mxu0 %v1139
      %v1295 = vpop.f32.mrb[0].mxu0
      %v1296 = vadd.f32 0.0, %v1295
      %v1297 = vpop.f32.mrb[0].mxu0
      %v1298 = vpop.f32.mrb[0].mxu0
      %v1299 = vadd.f32 0.0, %v1298
      %v1300 = vpop.f32.mrb[0].mxu0
      %1301 = vmatprep.mubr.bf16.mxu0 0
      %1302 = vmatmul.mubr.bf16.gmra.mrb[0].mxu0 %v1140
      %v1303 = vpop.f32.mrb[0].mxu0
      %v1304 = vadd.f32 0.0, %v1303
      %v1305 = vpop.f32.mrb[0].mxu0
      %v1306 = vpop.f32.mrb[0].mxu0
      %v1307 = vadd.f32 0.0, %v1306
      %v1308 = vpop.f32.mrb[0].mxu0
      %1309 = vmatprep.mubr.bf16.mxu0 0
      %1310 = vmatmul.mubr.bf16.gmra.mrb[0].mxu0 %v1141
      %v1311 = vpop.f32.mrb[0].mxu0
      %v1312 = vadd.f32 0.0, %v1311
      %v1313 = vpop.f32.mrb[0].mxu0
      %v1314 = vpop.f32.mrb[0].mxu0
      %v1315 = vadd.f32 0.0, %v1314
      %v1316 = vpop.f32.mrb[0].mxu0
      %1317 = vmatprep.mubr.bf16.mxu0 0
      %1318 = vmatmul.mubr.bf16.gmra.mrb[0].mxu0 %v1142
      %v1319 = vpop.f32.mrb[0].mxu0
      %v1320 = vadd.f32 0.0, %v1319
      %v1321 = vpop.f32.mrb[0].mxu0
      %v1322 = vpop.f32.mrb[0].mxu0
      %v1323 = vadd.f32 0.0, %v1322
      %v1324 = vpop.f32.mrb[0].mxu0
      %1325 = vmatprep.mubr.bf16.mxu0 0
      %1326 = vmatmul.mubr.bf16.gmra.mrb[0].mxu0 %v1143
      %v1327 = vpop.f32.mrb[0].mxu0
      %v1328 = vadd.f32 0.0, %v1327
      %v1329 = vpop.f32.mrb[0].mxu0
      %v1330 = vpop.f32.mrb[0].mxu0
      %v1331 = vadd.f32 0.0, %v1330
      %v1332 = vpop.f32.mrb[0].mxu0
      %1333 = vmatprep.mubr.bf16.mxu0 0
      %1334 = vmatmul.mubr.bf16.gmra.mrb[0].mxu0 %v1144
      %v1335 = vpop.f32.mrb[0].mxu0
      %v1336 = vadd.f32 0.0, %v1335
      %v1337 = vpop.f32.mrb[0].mxu0
      %v1338 = vpop.f32.mrb[0].mxu0
      %v1339 = vadd.f32 0.0, %v1338
      %v1340 = vpop.f32.mrb[0].mxu0
      %1341 = vmatprep.mubr.bf16.mxu0 0
      %1342 = vmatmul.mubr.bf16.gmra.mrb[0].mxu0 %v1145
      %v1343 = vpop.f32.mrb[0].mxu0
      %v1344 = vadd.f32 0.0, %v1343
      %v1345 = vpop.f32.mrb[0].mxu0
      %v1346 = vpop.f32.mrb[0].mxu0
      %v1347 = vadd.f32 0.0, %v1346
      %v1348 = vpop.f32.mrb[0].mxu0
      %1349 = vmatprep.mubr.bf16.mxu0 0
      %1350 = vmatmul.mubr.bf16.gmra.mrb[0].mxu0 %v1146
      %v1351 = vpop.f32.mrb[0].mxu0
      %v1352 = vadd.f32 0.0, %v1351
      %v1353 = vpop.f32.mrb[0].mxu0
      %v1354 = vpop.f32.mrb[0].mxu0
      %v1355 = vadd.f32 0.0, %v1354
      %v1356 = vpop.f32.mrb[0].mxu0
      %1357 = vmatprep.mubr.bf16.mxu0 0
      %1358 = vmatmul.mubr.bf16.gmra.mrb[0].mxu0 %v1147
      %v1359 = vpop.f32.mrb[0].mxu0
      %v1360 = vadd.f32 0.0, %v1359
      %v1361 = vpop.f32.mrb[0].mxu0
      %v1362 = vpop.f32.mrb[0].mxu0
      %v1363 = vadd.f32 0.0, %v1362
      %v1364 = vpop.f32.mrb[0].mxu0
      %1365 = vmatprep.mubr.bf16.mxu0 0
      %1366 = vmatmul.mubr.bf16.gmra.mrb[0].mxu0 %v1148
      %v1367 = vpop.f32.mrb[0].mxu0
      %v1368 = vadd.f32 0.0, %v1367
      %v1369 = vpop.f32.mrb[0].mxu0
      %v1370 = vpop.f32.mrb[0].mxu0
      %v1371 = vadd.f32 0.0, %v1370
      %v1372 = vpop.f32.mrb[0].mxu0
      %1373 = vdwg.mxu0
      %v1374 = vadd.f32 %v989, %v1248
      %v1375 = vadd.f32 %v990, %v1251
      %v1376 = vadd.f32 %v991, %v1256
      %v1377 = vadd.f32 %v992, %v1259
      %v1378 = vadd.f32 %v993, %v1264
      %v1379 = vadd.f32 %v994, %v1267
      %v1380 = vadd.f32 %v995, %v1272
      %v1381 = vadd.f32 %v996, %v1275
      %v1382 = vadd.f32 %v997, %v1280
      %v1383 = vadd.f32 %v998, %v1283
      %v1384 = vadd.f32 %v999, %v1288
      %v1385 = vadd.f32 %v1000, %v1291
      %v1386 = vadd.f32 %v1001, %v1296
      %v1387 = vadd.f32 %v1002, %v1299
      %v1388 = vadd.f32 %v1003, %v1304
      %v1389 = vadd.f32 %v1004, %v1307
      %v1390 = vadd.f32 %v1005, %v1312
      %v1391 = vadd.f32 %v1006, %v1315
      %v1392 = vadd.f32 %v1007, %v1320
      %v1393 = vadd.f32 %v1008, %v1323
      %v1394 = vadd.f32 %v1009, %v1328
      %v1395 = vadd.f32 %v1010, %v1331
      %v1396 = vadd.f32 %v1011, %v1336
      %v1397 = vadd.f32 %v1012, %v1339
      %v1398 = vadd.f32 %v1013, %v1344
      %v1399 = vadd.f32 %v1014, %v1347
      %v1400 = vadd.f32 %v1015, %v1352
      %v1401 = vadd.f32 %v1016, %v1355
      %v1402 = vadd.f32 %v1017, %v1360
      %v1403 = vadd.f32 %v1018, %v1363
      %v1404 = vadd.f32 %v1019, %v1368
      %v1405 = vadd.f32 %v1020, %v1371
      %v1406 = vmul.f32 %v1374, %v1374
      %v1407 = vmul.f32 %v1375, %v1375
      %v1408 = vmul.f32 %v1376, %v1376
      %v1409 = vmul.f32 %v1377, %v1377
      %v1410 = vmul.f32 %v1378, %v1378
      %v1411 = vmul.f32 %v1379, %v1379
      %v1412 = vmul.f32 %v1380, %v1380
      %v1413 = vmul.f32 %v1381, %v1381
      %v1414 = vmul.f32 %v1382, %v1382
      %v1415 = vmul.f32 %v1383, %v1383
      %v1416 = vmul.f32 %v1384, %v1384
      %v1417 = vmul.f32 %v1385, %v1385
      %v1418 = vmul.f32 %v1386, %v1386
      %v1419 = vmul.f32 %v1387, %v1387
      %v1420 = vmul.f32 %v1388, %v1388
      %v1421 = vmul.f32 %v1389, %v1389
      %v1422 = vmul.f32 %v1390, %v1390
      %v1423 = vmul.f32 %v1391, %v1391
      %v1424 = vmul.f32 %v1392, %v1392
      %v1425 = vmul.f32 %v1393, %v1393
      %v1426 = vmul.f32 %v1394, %v1394
      %v1427 = vmul.f32 %v1395, %v1395
      %v1428 = vmul.f32 %v1396, %v1396
      %v1429 = vmul.f32 %v1397, %v1397
      %v1430 = vmul.f32 %v1398, %v1398
      %v1431 = vmul.f32 %v1399, %v1399
      %v1432 = vmul.f32 %v1400, %v1400
      %v1433 = vmul.f32 %v1401, %v1401
      %v1434 = vmul.f32 %v1402, %v1402
      %v1435 = vmul.f32 %v1403, %v1403
      %v1436 = vmul.f32 %v1404, %v1404
      %v1437 = vmul.f32 %v1405, %v1405
      %1438 = vadd.xlane.f32.xlu0 %v1406
      %v1439 = vpop.xlane.xlu0 %1438
      %1440 = vadd.xlane.f32.xlu0 %v1407
      %v1441 = vpop.xlane.xlu0 %1440
      %1442 = vadd.xlane.f32.xlu0 %v1408
      %v1443 = vpop.xlane.xlu0 %1442
      %1444 = vadd.xlane.f32.xlu0 %v1409
      %v1445 = vpop.xlane.xlu0 %1444
      %1446 = vadd.xlane.f32.xlu0 %v1410
      %v1447 = vpop.xlane.xlu0 %1446
      %1448 = vadd.xlane.f32.xlu0 %v1411
      %v1449 = vpop.xlane.xlu0 %1448
      %1450 = vadd.xlane.f32.xlu0 %v1412
      %v1451 = vpop.xlane.xlu0 %1450
      %1452 = vadd.xlane.f32.xlu0 %v1413
      %v1453 = vpop.xlane.xlu0 %1452
      %1454 = vadd.xlane.f32.xlu0 %v1414
      %v1455 = vpop.xlane.xlu0 %1454
      %1456 = vadd.xlane.f32.xlu0 %v1415
      %v1457 = vpop.xlane.xlu0 %1456
      %1458 = vadd.xlane.f32.xlu0 %v1416
      %v1459 = vpop.xlane.xlu0 %1458
      %1460 = vadd.xlane.f32.xlu0 %v1417
      %v1461 = vpop.xlane.xlu0 %1460
      %1462 = vadd.xlane.f32.xlu0 %v1418
      %v1463 = vpop.xlane.xlu0 %1462
      %1464 = vadd.xlane.f32.xlu0 %v1419
      %v1465 = vpop.xlane.xlu0 %1464
      %1466 = vadd.xlane.f32.xlu0 %v1420
      %v1467 = vpop.xlane.xlu0 %1466
      %1468 = vadd.xlane.f32.xlu0 %v1421
      %v1469 = vpop.xlane.xlu0 %1468
      %1470 = vadd.xlane.f32.xlu0 %v1422
      %v1471 = vpop.xlane.xlu0 %1470
      %1472 = vadd.xlane.f32.xlu0 %v1423
      %v1473 = vpop.xlane.xlu0 %1472
      %1474 = vadd.xlane.f32.xlu0 %v1424
      %v1475 = vpop.xlane.xlu0 %1474
      %1476 = vadd.xlane.f32.xlu0 %v1425
      %v1477 = vpop.xlane.xlu0 %1476
      %1478 = vadd.xlane.f32.xlu0 %v1426
      %v1479 = vpop.xlane.xlu0 %1478
      %1480 = vadd.xlane.f32.xlu0 %v1427
      %v1481 = vpop.xlane.xlu0 %1480
      %1482 = vadd.xlane.f32.xlu0 %v1428
      %v1483 = vpop.xlane.xlu0 %1482
      %1484 = vadd.xlane.f32.xlu0 %v1429
      %v1485 = vpop.xlane.xlu0 %1484
      %1486 = vadd.xlane.f32.xlu0 %v1430
      %v1487 = vpop.xlane.xlu0 %1486
      %1488 = vadd.xlane.f32.xlu0 %v1431
      %v1489 = vpop.xlane.xlu0 %1488
      %1490 = vadd.xlane.f32.xlu0 %v1432
      %v1491 = vpop.xlane.xlu0 %1490
      %1492 = vadd.xlane.f32.xlu0 %v1433
      %v1493 = vpop.xlane.xlu0 %1492
      %1494 = vadd.xlane.f32.xlu0 %v1434
      %v1495 = vpop.xlane.xlu0 %1494
      %1496 = vadd.xlane.f32.xlu0 %v1435
      %v1497 = vpop.xlane.xlu0 %1496
      %1498 = vadd.xlane.f32.xlu0 %v1436
      %v1499 = vpop.xlane.xlu0 %1498
      %1500 = vadd.xlane.f32.xlu0 %v1437
      %v1501 = vpop.xlane.xlu0 %1500
      %v1502 = vmax.f32 %v1439, 1e-24
      %v1503 = vmax.f32 %v1441, 1e-24
      %v1504 = vmax.f32 %v1443, 1e-24
      %v1505 = vmax.f32 %v1445, 1e-24
      %v1506 = vmax.f32 %v1447, 1e-24
      %v1507 = vmax.f32 %v1449, 1e-24
      %v1508 = vmax.f32 %v1451, 1e-24
      %v1509 = vmax.f32 %v1453, 1e-24
      %v1510 = vmax.f32 %v1455, 1e-24
      %v1511 = vmax.f32 %v1457, 1e-24
      %v1512 = vmax.f32 %v1459, 1e-24
      %v1513 = vmax.f32 %v1461, 1e-24
      %v1514 = vmax.f32 %v1463, 1e-24
      %v1515 = vmax.f32 %v1465, 1e-24
      %v1516 = vmax.f32 %v1467, 1e-24
      %v1517 = vmax.f32 %v1469, 1e-24
      %v1518 = vmax.f32 %v1471, 1e-24
      %v1519 = vmax.f32 %v1473, 1e-24
      %v1520 = vmax.f32 %v1475, 1e-24
      %v1521 = vmax.f32 %v1477, 1e-24
      %v1522 = vmax.f32 %v1479, 1e-24
      %v1523 = vmax.f32 %v1481, 1e-24
      %v1524 = vmax.f32 %v1483, 1e-24
      %v1525 = vmax.f32 %v1485, 1e-24
      %v1526 = vmax.f32 %v1487, 1e-24
      %v1527 = vmax.f32 %v1489, 1e-24
      %v1528 = vmax.f32 %v1491, 1e-24
      %v1529 = vmax.f32 %v1493, 1e-24
      %v1530 = vmax.f32 %v1495, 1e-24
      %v1531 = vmax.f32 %v1497, 1e-24
      %v1532 = vmax.f32 %v1499, 1e-24
      %v1533 = vmax.f32 %v1501, 1e-24
      %v1534 = vrsqrt.pop %v1502
      %v1535 = vrsqrt.pop %v1503
      %v1536 = vrsqrt.pop %v1504
      %v1537 = vrsqrt.pop %v1505
      %v1538 = vrsqrt.pop %v1506
      %v1539 = vrsqrt.pop %v1507
      %v1540 = vrsqrt.pop %v1508
      %v1541 = vrsqrt.pop %v1509
      %v1542 = vrsqrt.pop %v1510
      %v1543 = vrsqrt.pop %v1511
      %v1544 = vrsqrt.pop %v1512
      %v1545 = vrsqrt.pop %v1513
      %v1546 = vrsqrt.pop %v1514
      %v1547 = vrsqrt.pop %v1515
      %v1548 = vrsqrt.pop %v1516
      %v1549 = vrsqrt.pop %v1517
      %v1550 = vrsqrt.pop %v1518
      %v1551 = vrsqrt.pop %v1519
      %v1552 = vrsqrt.pop %v1520
      %v1553 = vrsqrt.pop %v1521
      %v1554 = vrsqrt.pop %v1522
      %v1555 = vrsqrt.pop %v1523
      %v1556 = vrsqrt.pop %v1524
      %v1557 = vrsqrt.pop %v1525
      %v1558 = vrsqrt.pop %v1526
      %v1559 = vrsqrt.pop %v1527
      %v1560 = vrsqrt.pop %v1528
      %v1561 = vrsqrt.pop %v1529
      %v1562 = vrsqrt.pop %v1530
      %v1563 = vrsqrt.pop %v1531
      %v1564 = vrsqrt.pop %v1532
      %v1565 = vrsqrt.pop %v1533
      %v1566 = vmul.f32 %v1374, %v1534
      %v1567 = vmul.f32 %v1375, %v1535
      %v1568 = vmul.f32 %v1376, %v1536
      %v1569 = vmul.f32 %v1377, %v1537
      %v1570 = vmul.f32 %v1378, %v1538
      %v1571 = vmul.f32 %v1379, %v1539
      %v1572 = vmul.f32 %v1380, %v1540
      %v1573 = vmul.f32 %v1381, %v1541
      %v1574 = vmul.f32 %v1382, %v1542
      %v1575 = vmul.f32 %v1383, %v1543
      %v1576 = vmul.f32 %v1384, %v1544
      %v1577 = vmul.f32 %v1385, %v1545
      %v1578 = vmul.f32 %v1386, %v1546
      %v1579 = vmul.f32 %v1387, %v1547
      %v1580 = vmul.f32 %v1388, %v1548
      %v1581 = vmul.f32 %v1389, %v1549
      %v1582 = vmul.f32 %v1390, %v1550
      %v1583 = vmul.f32 %v1391, %v1551
      %v1584 = vmul.f32 %v1392, %v1552
      %v1585 = vmul.f32 %v1393, %v1553
      %v1586 = vmul.f32 %v1394, %v1554
      %v1587 = vmul.f32 %v1395, %v1555
      %v1588 = vmul.f32 %v1396, %v1556
      %v1589 = vmul.f32 %v1397, %v1557
      %v1590 = vmul.f32 %v1398, %v1558
      %v1591 = vmul.f32 %v1399, %v1559
      %v1592 = vmul.f32 %v1400, %v1560
      %v1593 = vmul.f32 %v1401, %v1561
      %v1594 = vmul.f32 %v1402, %v1562
      %v1595 = vmul.f32 %v1403, %v1563
      %v1596 = vmul.f32 %v1404, %v1564
      %v1597 = vmul.f32 %v1405, %v1565
      %v1598 = vmax.f32 %v1566, 0.0
      %v1599 = vmax.f32 %v1567, 0.0
      %v1600 = vmax.f32 %v1568, 0.0
      %v1601 = vmax.f32 %v1569, 0.0
      %v1602 = vmax.f32 %v1570, 0.0
      %v1603 = vmax.f32 %v1571, 0.0
      %v1604 = vmax.f32 %v1572, 0.0
      %v1605 = vmax.f32 %v1573, 0.0
      %v1606 = vmax.f32 %v1574, 0.0
      %v1607 = vmax.f32 %v1575, 0.0
      %v1608 = vmax.f32 %v1576, 0.0
      %v1609 = vmax.f32 %v1577, 0.0
      %v1610 = vmax.f32 %v1578, 0.0
      %v1611 = vmax.f32 %v1579, 0.0
      %v1612 = vmax.f32 %v1580, 0.0
      %v1613 = vmax.f32 %v1581, 0.0
      %v1614 = vmax.f32 %v1582, 0.0
      %v1615 = vmax.f32 %v1583, 0.0
      %v1616 = vmax.f32 %v1584, 0.0
      %v1617 = vmax.f32 %v1585, 0.0
      %v1618 = vmax.f32 %v1586, 0.0
      %v1619 = vmax.f32 %v1587, 0.0
      %v1620 = vmax.f32 %v1588, 0.0
      %v1621 = vmax.f32 %v1589, 0.0
      %v1622 = vmax.f32 %v1590, 0.0
      %v1623 = vmax.f32 %v1591, 0.0
      %v1624 = vmax.f32 %v1592, 0.0
      %v1625 = vmax.f32 %v1593, 0.0
      %v1626 = vmax.f32 %v1594, 0.0
      %v1627 = vmax.f32 %v1595, 0.0
      %v1628 = vmax.f32 %v1596, 0.0
      %v1629 = vmax.f32 %v1597, 0.0
      %v1630 = vpack.c.bf16 %v1599, %v1598
      %v1631 = vpack.c.bf16 %v1601, %v1600
      %v1632 = vpack.c.bf16 %v1603, %v1602
      %v1633 = vpack.c.bf16 %v1605, %v1604
      %v1634 = vpack.c.bf16 %v1607, %v1606
      %v1635 = vpack.c.bf16 %v1609, %v1608
      %v1636 = vpack.c.bf16 %v1611, %v1610
      %v1637 = vpack.c.bf16 %v1613, %v1612
      %v1638 = vpack.c.bf16 %v1615, %v1614
      %v1639 = vpack.c.bf16 %v1617, %v1616
      %v1640 = vpack.c.bf16 %v1619, %v1618
      %v1641 = vpack.c.bf16 %v1621, %v1620
      %v1642 = vpack.c.bf16 %v1623, %v1622
      %v1643 = vpack.c.bf16 %v1625, %v1624
      %v1644 = vpack.c.bf16 %v1627, %v1626
      %v1645 = vpack.c.bf16 %v1629, %v1628
      %v1662 = vunpack.c.l.b16 %v1630
      %v1663 = vunpack.c.h.b16 %v1630
      %v1664 = vunpack.c.l.b16 %v1631
      %v1665 = vunpack.c.h.b16 %v1631
      %v1666 = vunpack.c.l.b16 %v1632
      %v1667 = vunpack.c.h.b16 %v1632
      %v1668 = vunpack.c.l.b16 %v1633
      %v1669 = vunpack.c.h.b16 %v1633
      %v1670 = vunpack.c.l.b16 %v1634
      %v1671 = vunpack.c.h.b16 %v1634
      %v1672 = vunpack.c.l.b16 %v1635
      %v1673 = vunpack.c.h.b16 %v1635
      %v1674 = vunpack.c.l.b16 %v1636
      %v1675 = vunpack.c.h.b16 %v1636
      %v1676 = vunpack.c.l.b16 %v1637
      %v1677 = vunpack.c.h.b16 %v1637
      %v1678 = vunpack.c.l.b16 %v1638
      %v1679 = vunpack.c.h.b16 %v1638
      %v1680 = vunpack.c.l.b16 %v1639
      %v1681 = vunpack.c.h.b16 %v1639
      %v1682 = vunpack.c.l.b16 %v1640
      %v1683 = vunpack.c.h.b16 %v1640
      %v1684 = vunpack.c.l.b16 %v1641
      %v1685 = vunpack.c.h.b16 %v1641
      %v1686 = vunpack.c.l.b16 %v1642
      %v1687 = vunpack.c.h.b16 %v1642
      %v1688 = vunpack.c.l.b16 %v1643
      %v1689 = vunpack.c.h.b16 %v1643
      %v1690 = vunpack.c.l.b16 %v1644
      %v1691 = vunpack.c.h.b16 %v1644
      %v1692 = vunpack.c.l.b16 %v1645
      %v1693 = vunpack.c.h.b16 %v1645
      %v1694 = vpack.c.b16 %v1662, %v1662
      %v1695 = vpack.c.b16 %v1663, %v1663
      %v1696 = vpack.c.b16 %v1664, %v1664
      %v1697 = vpack.c.b16 %v1665, %v1665
      %v1698 = vpack.c.b16 %v1666, %v1666
      %v1699 = vpack.c.b16 %v1667, %v1667
      %v1700 = vpack.c.b16 %v1668, %v1668
      %v1701 = vpack.c.b16 %v1669, %v1669
      %v1702 = vpack.c.b16 %v1670, %v1670
      %v1703 = vpack.c.b16 %v1671, %v1671
      %v1704 = vpack.c.b16 %v1672, %v1672
      %v1705 = vpack.c.b16 %v1673, %v1673
      %v1706 = vpack.c.b16 %v1674, %v1674
      %v1707 = vpack.c.b16 %v1675, %v1675
      %v1708 = vpack.c.b16 %v1676, %v1676
      %v1709 = vpack.c.b16 %v1677, %v1677
      %v1710 = vpack.c.b16 %v1678, %v1678
      %v1711 = vpack.c.b16 %v1679, %v1679
      %v1712 = vpack.c.b16 %v1680, %v1680
      %v1713 = vpack.c.b16 %v1681, %v1681
      %v1714 = vpack.c.b16 %v1682, %v1682
      %v1715 = vpack.c.b16 %v1683, %v1683
      %v1716 = vpack.c.b16 %v1684, %v1684
      %v1717 = vpack.c.b16 %v1685, %v1685
      %v1718 = vpack.c.b16 %v1686, %v1686
      %v1719 = vpack.c.b16 %v1687, %v1687
      %v1720 = vpack.c.b16 %v1688, %v1688
      %v1721 = vpack.c.b16 %v1689, %v1689
      %v1722 = vpack.c.b16 %v1690, %v1690
      %v1723 = vpack.c.b16 %v1691, %v1691
      %v1724 = vpack.c.b16 %v1692, %v1692
      %v1725 = vpack.c.b16 %v1693, %v1693
      %1758 = vst [vmem:[#allocation12] sm:$0xf] %v1694
      %1759 = vst [vmem:[#allocation12 + $0x4] sm:$0xf] %v1695
      %1760 = vst [vmem:[#allocation12 + $0x8] sm:$0xf] %v1696
      %1761 = vst [vmem:[#allocation12 + $0xc] sm:$0xf] %v1697
      %1762 = vst [vmem:[#allocation12 + $0x10] sm:$0xf] %v1698
      %1763 = vst [vmem:[#allocation12 + $0x14] sm:$0xf] %v1699
      %1764 = vst [vmem:[#allocation12 + $0x18] sm:$0xf] %v1700
      %1765 = vst [vmem:[#allocation12 + $0x1c] sm:$0xf] %v1701
      %1766 = vst [vmem:[#allocation12 + $0x20] sm:$0xf] %v1702
      %1767 = vst [vmem:[#allocation12 + $0x24] sm:$0xf] %v1703
      %1768 = vst [vmem:[#allocation12 + $0x28] sm:$0xf] %v1704
      %1769 = vst [vmem:[#allocation12 + $0x2c] sm:$0xf] %v1705
      %1770 = vst [vmem:[#allocation12 + $0x30] sm:$0xf] %v1706
      %1771 = vst [vmem:[#allocation12 + $0x34] sm:$0xf] %v1707
      %1772 = vst [vmem:[#allocation12 + $0x38] sm:$0xf] %v1708
      %1773 = vst [vmem:[#allocation12 + $0x3c] sm:$0xf] %v1709
      %1774 = vst [vmem:[#allocation12 + $0x40] sm:$0xf] %v1710
      %1775 = vst [vmem:[#allocation12 + $0x44] sm:$0xf] %v1711
      %1776 = vst [vmem:[#allocation12 + $0x48] sm:$0xf] %v1712
      %1777 = vst [vmem:[#allocation12 + $0x4c] sm:$0xf] %v1713
      %1778 = vst [vmem:[#allocation12 + $0x50] sm:$0xf] %v1714
      %1779 = vst [vmem:[#allocation12 + $0x54] sm:$0xf] %v1715
      %1780 = vst [vmem:[#allocation12 + $0x58] sm:$0xf] %v1716
      %1781 = vst [vmem:[#allocation12 + $0x5c] sm:$0xf] %v1717
      %1782 = vst [vmem:[#allocation12 + $0x60] sm:$0xf] %v1718
      %1783 = vst [vmem:[#allocation12 + $0x64] sm:$0xf] %v1719
      %1784 = vst [vmem:[#allocation12 + $0x68] sm:$0xf] %v1720
      %1785 = vst [vmem:[#allocation12 + $0x6c] sm:$0xf] %v1721
      %1786 = vst [vmem:[#allocation12 + $0x70] sm:$0xf] %v1722
      %1787 = vst [vmem:[#allocation12 + $0x74] sm:$0xf] %v1723
      %1788 = vst [vmem:[#allocation12 + $0x78] sm:$0xf] %v1724
      %1789 = vst [vmem:[#allocation12 + $0x7c] sm:$0xf] %v1725
    $region53: #{tpu_custom_call.1} parent=1 // pred_fallthru
      _
    // Predicated region
    $region54: #{tpu_custom_call.1} parent=1 // pred_check
      _
    $region55: #{tpu_custom_call.1} parent=1 // pred_check_branch
      %1791 = sbr.rel (0) target = $region57
    $region56: #{tpu_custom_call.1} parent=1 // pred_region
      %s1793 = ssub.s32 2048, 2048
      %1794 = vsyncadd [#allocation5], %s1793
      %s1795 = sshll.u32 [#allocation12], 4
      %s1796 = int_to_ptr.vmem [resolvable:$true] %s1795
      %1801 = dma.vmem_to_hbm [thread:$0]  %s1796, 2048, %s6, [#allocation5], 64, 64, 4
    $region57: #{tpu_custom_call.1} parent=1 // pred_fallthru
      _
    // Predicated region
    $region58: #{tpu_custom_call.1} parent=1 // pred_check
      _
    $region59: #{tpu_custom_call.1} parent=1 // pred_check_branch
      %1803 = sbr.rel (0) target = $region61
    $region60: #{tpu_custom_call.1} parent=1 // pred_region
      %1804 = dma.done [#allocation5], 2048
    $region61: #{tpu_custom_call.1} parent=1 // pred_fallthru
      _
    %1805 = vsyncpa [#allocation4], 1
    %1806 = vsyncpa [#allocation7], 1
    %1807 = vsyncpa [#allocation10], 1
    %1808 = vsyncpa [#allocation5], 1

</llo_original>
